<compile_context>
chip_gen: v5e
topology: v5e:2x2
jax: 0.10.0
libtpu: 0.0.40
codegen_flags: <defaults>
</compile_context>

<pallas_src>
import functools

import jax
import jax.numpy as jnp
from jax import lax
from jax.experimental import pallas as pl
from jax.experimental.pallas import tpu as pltpu


# ---------------------------------------------------------------------------
# Kernel
# ---------------------------------------------------------------------------
def attention_kernel(enc_ref, dec_ref, wet_ref, wdt_ref, bsum_ref, wf_ref,
                     awe_ref, alpha_ref, *, p_valid, mxu_dtype):
    # Per-grid-step views:
    #   enc_ref:  (Bb, P, E) f32     dec_ref:  (Bb, D) f32
    #   wet_ref:  (E, A) mxu_dtype   wdt_ref:  (D, A) mxu_dtype
    #   bsum_ref: (1, A) f32         wf_ref:   (1, A) f32
    #   awe_ref:  (Bb, E) f32        alpha_ref: (Bb, P) f32
    Bb, P, E = enc_ref.shape
    A = wet_ref.shape[1]

    enc = enc_ref[...]                                           # (Bb, P, E) f32

    # att1 = encoder_att(encoder_out): one flattened MXU matmul over Bb*P rows.
    # Reshape in f32 (P is padded to a sublane multiple -> free), then cast the
    # MXU operand (cheap VPU op); accumulation stays f32.
    att1 = jnp.dot(enc.reshape(Bb * P, E).astype(mxu_dtype), wet_ref[...],
                   preferred_element_type=jnp.float32).reshape(Bb, P, A)

    # att2 = decoder_att(decoder_hidden) + (b_enc + b_dec)  -> (Bb, A)
    att2 = jnp.dot(dec_ref[...].astype(mxu_dtype), wdt_ref[...],
                   preferred_element_type=jnp.float32) + bsum_ref[...]

    # relu(att1 + att2.unsqueeze(1))  (all element-wise work in f32)
    h = jnp.maximum(att1 + att2[:, None, :], 0.0)                # (Bb, P, A)

    # full_att: fold the (A -> 1) projection into a VPU multiply + lane
    # reduction over A so the scores land lane-major as (Bb, P).
    # NOTE: the full_att bias is a per-logit constant -> softmax no-op; dropped.
    s = jnp.sum(h * wf_ref[...], axis=-1)                        # (Bb, P)

    # Mask padded pixels before the softmax.
    if p_valid < P:
        pix = lax.broadcasted_iota(jnp.int32, (Bb, P), 1)
        s = jnp.where(pix < p_valid, s, -jnp.inf)

    # Softmax over pixels (last axis == lane axis); exact divide so each alpha
    # row sums to 1 to f32 precision.
    m = jnp.max(s, axis=-1, keepdims=True)
    e = jnp.exp(s - m)
    alpha = e / jnp.sum(e, axis=-1, keepdims=True)               # (Bb, P)

    # Attention-weighted encoding via VPU multiply + sublane reduce over P
    # (keeps the MXU free for the encoder projection; exact f32 enc operand).
    awe = jnp.sum(enc * alpha[:, :, None], axis=1)               # (Bb, E)

    awe_ref[...] = awe.astype(awe_ref.dtype)
    alpha_ref[...] = alpha.astype(alpha_ref.dtype)


# ---------------------------------------------------------------------------
# Sizing helpers
# ---------------------------------------------------------------------------
def _round_up(x, m):
    return (x + m - 1) // m * m


def _device_profile():
    """Per-generation VMEM budget / limit, core count and MXU dtype default."""
    kind = ""
    try:
        kind = jax.devices()[0].device_kind.lower()
    except Exception:
        pass
    if "v7" in kind or "7x" in kind:
        # 64 MiB physical VMEM, 2 TensorCores per chip.
        return dict(vmem_budget=40 << 20, vmem_limit=48 << 20, cores=2,
                    bf16_mxu=True)
    if "v6" in kind:
        return dict(vmem_budget=80 << 20, vmem_limit=100 << 20, cores=1,
                    bf16_mxu=True)
    if "v5p" in kind:
        return dict(vmem_budget=80 << 20, vmem_limit=100 << 20, cores=2,
                    bf16_mxu=True)
    if "v5" in kind:
        # v5e: tight 16 MiB scoped default; raise it, bf16 only on the MXU.
        return dict(vmem_budget=80 << 20, vmem_limit=100 << 20, cores=1,
                    bf16_mxu=True)
    # Unknown part: conservative defaults, f32 MXU.
    return dict(vmem_budget=24 << 20, vmem_limit=None, cores=1, bf16_mxu=False)


def _pick_batch_block(B, P, E, D, A, mxu_dtype, prof):
    """Largest 8-aligned batch block whose per-step residency fits the budget."""
    w_it = jnp.dtype(mxu_dtype).itemsize
    # Per-batch-row bytes: double-buffered enc/dec input blocks and output
    # blocks, plus in-kernel f32 intermediates (att1, h, scores/alpha), plus
    # the MXU-dtype copy of the enc tile.
    per_row = (2 * P * E * 4                     # enc block (double-buffered)
               + 2 * D * 4                       # dec block
               + 2 * (E + P) * 4                 # awe / alpha output blocks
               + P * (2 * A * 4 + E * w_it + 4 * 4)  # att1, h, enc cast, s/e/alpha
               + E * 4)                          # awe
    fixed = 2 * (E * A + D * A) * w_it + 4 * A * 4   # weights (worst case 2x)
    avail = max(prof["vmem_budget"] - fixed, per_row * 8)
    blk = int(avail // per_row)
    blk = max(8, min(blk // 8 * 8, 1024))

    B8 = _round_up(B, 8)
    blk = min(blk, B8)
    # Keep >= 2 grid steps when the part has 2 TensorCores so the "parallel"
    # batch axis can be sharded across them.
    if prof["cores"] >= 2 and B8 > 8:
        blk = min(blk, max(8, (B8 // 2) // 8 * 8))
    return blk


# ---------------------------------------------------------------------------
# Wrapper
# ---------------------------------------------------------------------------
def attention_forward(encoder_out, decoder_hidden, params, *,
                      mxu_dtype=None, batch_block=None):
    B, P, E = encoder_out.shape
    D = decoder_hidden.shape[1]
    A = params["w_enc"].shape[0]

    prof = _device_profile()
    if mxu_dtype is None:
        mxu_dtype = jnp.bfloat16 if prof["bf16_mxu"] else jnp.float32

    encoder_out = encoder_out.astype(jnp.float32)
    decoder_hidden = decoder_hidden.astype(jnp.float32)

    # Pad the pixel axis to a sublane multiple so the (Bb*P, E) reshape is free.
    P_pad = _round_up(P, 8)
    if P_pad != P:
        encoder_out = jnp.pad(encoder_out, ((0, 0), (0, P_pad - P), (0, 0)))

    # Batch block from the per-generation VMEM budget (always a multiple of 8,
    # or equal to the padded batch); pad the batch instead of odd divisors.
    if batch_block is None:
        blk_b = _pick_batch_block(B, P_pad, E, D, A, mxu_dtype, prof)
    else:
        blk_b = batch_block
    B_pad = _round_up(B, blk_b)
    if B_pad != B:
        encoder_out = jnp.pad(encoder_out, ((0, B_pad - B), (0, 0), (0, 0)))
        decoder_hidden = jnp.pad(decoder_hidden, ((0, B_pad - B), (0, 0)))

    # Pre-transpose weights once in the wrapper (PyTorch stores (out, in)) and
    # pre-cast only the small weights to the MXU dtype.
    w_enc_t = params["w_enc"].T.astype(mxu_dtype)                # (E, A)
    w_dec_t = params["w_dec"].T.astype(mxu_dtype)                # (D, A)
    b_sum = (params["b_enc"] + params["b_dec"]).reshape(1, A).astype(jnp.float32)
    w_full = params["w_full"].reshape(1, A).astype(jnp.float32)
    # b_full intentionally not passed: constant logit shift is a softmax no-op.

    grid = (B_pad // blk_b,)
    kernel = functools.partial(attention_kernel, p_valid=P, mxu_dtype=mxu_dtype)

    cost = pl.CostEstimate(
        flops=(2 * B_pad * P_pad * E * A + 2 * B_pad * D * A
               + 2 * B_pad * P_pad * A + 2 * B_pad * P_pad * E),
        transcendentals=B_pad * P_pad,
        bytes_accessed=(B_pad * P_pad * E * 4 + B_pad * D * 4
                        + (E * A + D * A) * jnp.dtype(mxu_dtype).itemsize
                        + B_pad * (E + P_pad) * 4),
    )

    out_shape = (jax.ShapeDtypeStruct((B_pad, E), jnp.float32),
                 jax.ShapeDtypeStruct((B_pad, P_pad), jnp.float32))
    out_specs = [
        pl.BlockSpec((blk_b, E), lambda b: (b, 0)),              # awe, lane-dense E
        pl.BlockSpec((blk_b, P_pad), lambda b: (b, 0)),          # alpha, lane-dense P
    ]

    def _in_specs(single_buffer_weights):
        kw = dict(pipeline_mode=pl.Buffered(1)) if single_buffer_weights else {}
        return [
            pl.BlockSpec((blk_b, P_pad, E), lambda b: (b, 0, 0)),  # enc block
            pl.BlockSpec((blk_b, D), lambda b: (b, 0)),            # dec block
            pl.BlockSpec((E, A), lambda b: (0, 0), **kw),          # W_enc^T (resident)
            pl.BlockSpec((D, A), lambda b: (0, 0), **kw),          # W_dec^T (resident)
            pl.BlockSpec((1, A), lambda b: (0, 0), **kw),          # b_enc + b_dec
            pl.BlockSpec((1, A), lambda b: (0, 0), **kw),          # W_full row
        ]

    def _run(single_buffer_weights):
        return pl.pallas_call(
            kernel,
            out_shape=out_shape,
            grid_spec=pltpu.PrefetchScalarGridSpec(
                num_scalar_prefetch=0,
                grid=grid,
                in_specs=_in_specs(single_buffer_weights),
                out_specs=out_specs),
            compiler_params=pltpu.CompilerParams(
                dimension_semantics=("parallel",),
                vmem_limit_bytes=prof["vmem_limit"]),
            cost_estimate=cost,
        )(encoder_out, decoder_hidden, w_enc_t, w_dec_t, b_sum, w_full)

    try:
        awe, alpha = _run(single_buffer_weights=True)
    except Exception:
        # pl.Buffered(1) not supported on this jax version -> default buffering.
        awe, alpha = _run(single_buffer_weights=False)

    return awe[:B], alpha[:B, :P]


# ---------------------------------------------------------------------------
# Reference + params
# ---------------------------------------------------------------------------
def attention_reference(encoder_out, decoder_hidden, p):
    att1 = encoder_out @ p["w_enc"].T + p["b_enc"]                      # (B, P, A)
    att2 = decoder_hidden @ p["w_dec"].T + p["b_dec"]                   # (B, A)
    att = (jax.nn.relu(att1 + att2[:, None, :]) @ p["w_full"].T
           + p["b_full"])[..., 0]                                       # (B, P)
    alpha = jax.nn.softmax(att, axis=1)
    awe = (encoder_out * alpha[:, :, None]).sum(axis=1)                 # (B, E)
    return awe, alpha


def init_params(key, encoder_dim, decoder_dim, attention_dim):
    k = jax.random.split(key, 6)
    s_e = 1.0 / jnp.sqrt(encoder_dim)
    s_d = 1.0 / jnp.sqrt(decoder_dim)
    s_a = 1.0 / jnp.sqrt(attention_dim)
    return {
        "w_enc": jax.random.uniform(k[0], (attention_dim, encoder_dim),
                                    jnp.float32, -s_e, s_e),
        "b_enc": jax.random.uniform(k[1], (attention_dim,), jnp.float32, -s_e, s_e),
        "w_dec": jax.random.uniform(k[2], (attention_dim, decoder_dim),
                                    jnp.float32, -s_d, s_d),
        "b_dec": jax.random.uniform(k[3], (attention_dim,), jnp.float32, -s_d, s_d),
        "w_full": jax.random.uniform(k[4], (1, attention_dim), jnp.float32, -s_a, s_a),
        "b_full": jax.random.uniform(k[5], (1,), jnp.float32, -s_a, s_a),
    }


if __name__ == "__main__":
    # batch, num_pixels, encoder_dim, decoder_dim, attention_dim
    B, P, E, D, A = 2, 16, 32, 32, 32

    key = jax.random.PRNGKey(0)
    k_enc, k_dec, k_par = jax.random.split(key, 3)
    encoder_out = jax.random.normal(k_enc, (B, P, E), jnp.float32)
    decoder_hidden = jax.random.normal(k_dec, (B, D), jnp.float32)
    params = init_params(k_par, E, D, A)

    awe, alpha = attention_forward(encoder_out, decoder_hidden, params)
    awe, alpha = jax.block_until_ready((awe, alpha))

    awe_ref, alpha_ref = attention_reference(encoder_out, decoder_hidden, params)

    # Tolerance depends on whether this part defaults to bf16 MXU operands
    # (v5e/v6e/v7x) or f32 (unknown part).
    tol = 3e-2 if _device_profile()["bf16_mxu"] else 1e-4

    assert awe.shape == (B, E) and alpha.shape == (B, P)
    assert jnp.allclose(alpha.sum(axis=1), 1.0, atol=1e-5), "alpha not normalized"
    assert jnp.allclose(awe, awe_ref, atol=tol, rtol=tol), "awe mismatch"
    assert jnp.allclose(alpha, alpha_ref, atol=tol, rtol=tol), "alpha mismatch"

    print("KERNEL_OK")
</pallas_src>

<mosaic_0001>
module attributes {stable_mosaic.version = 11 : i64} {
  func.func @attention_kernel(%arg0: i32, %arg1: memref<8x16x32xf32, #tpu.memory_space<vmem>>, %arg2: memref<8x32xf32, #tpu.memory_space<vmem>>, %arg3: memref<32x32xf32, #tpu.memory_space<vmem>>, %arg4: memref<32x32xf32, #tpu.memory_space<vmem>>, %arg5: memref<1x32xf32, #tpu.memory_space<vmem>>, %arg6: memref<1x32xf32, #tpu.memory_space<vmem>>, %arg7: memref<8x32xf32, #tpu.memory_space<vmem>>, %arg8: memref<8x16xf32, #tpu.memory_space<vmem>>) attributes {dimension_semantics = [#tpu.dimension_semantics<parallel>], iteration_bounds = array<i64: 1>, scalar_prefetch = 0 : i64, scratch_operands = 0 : i64, tpu.core_type = #tpu.core_type<tc>, window_params = [{transform_indices = @transform_0, window_bounds = array<i64: 8, 16, 32>}, {transform_indices = @transform_1, window_bounds = array<i64: 8, 32>}, {pipeline_mode = #tpu.pipeline_mode<synchronous>, transform_indices = @transform_2, window_bounds = array<i64: 32, 32>}, {pipeline_mode = #tpu.pipeline_mode<synchronous>, transform_indices = @transform_3, window_bounds = array<i64: 32, 32>}, {pipeline_mode = #tpu.pipeline_mode<synchronous>, transform_indices = @transform_4, window_bounds = array<i64: 1, 32>}, {pipeline_mode = #tpu.pipeline_mode<synchronous>, transform_indices = @transform_5, window_bounds = array<i64: 1, 32>}, {transform_indices = @transform_6, window_bounds = array<i64: 8, 32>}, {transform_indices = @transform_7, window_bounds = array<i64: 8, 16>}]} {
    %c0 = arith.constant 0 : index
    %c0_0 = arith.constant 0 : index
    %c0_1 = arith.constant 0 : index
    %0 = vector.load %arg1[%c0, %c0_0, %c0_1] : memref<8x16x32xf32, #tpu.memory_space<vmem>>, vector<8x16x32xf32>
    %1 = vector.shape_cast %0 : vector<8x16x32xf32> to vector<128x32xf32>
    %c0_2 = arith.constant 0 : index
    %c0_3 = arith.constant 0 : index
    %2 = vector.load %arg3[%c0_2, %c0_3] : memref<32x32xf32, #tpu.memory_space<vmem>>, vector<32x32xf32>
    %cst = arith.constant dense<0.000000e+00> : vector<128x32xf32>
    %3 = tpu.matmul %1, %2, %cst {dimension_numbers = #tpu.dot_dimension_numbers<[1], [0], [0], [1], [0, 0, 1, 1], [], []>} : vector<128x32xf32>, vector<32x32xf32>, vector<128x32xf32> -> vector<128x32xf32>
    %4 = vector.shape_cast %3 : vector<128x32xf32> to vector<8x16x32xf32>
    %c0_4 = arith.constant 0 : index
    %c0_5 = arith.constant 0 : index
    %5 = vector.load %arg2[%c0_4, %c0_5] : memref<8x32xf32, #tpu.memory_space<vmem>>, vector<8x32xf32>
    %c0_6 = arith.constant 0 : index
    %c0_7 = arith.constant 0 : index
    %6 = vector.load %arg4[%c0_6, %c0_7] : memref<32x32xf32, #tpu.memory_space<vmem>>, vector<32x32xf32>
    %cst_8 = arith.constant dense<0.000000e+00> : vector<8x32xf32>
    %7 = tpu.matmul %5, %6, %cst_8 {dimension_numbers = #tpu.dot_dimension_numbers<[1], [0], [0], [1], [0, 0, 1, 1], [], []>} : vector<8x32xf32>, vector<32x32xf32>, vector<8x32xf32> -> vector<8x32xf32>
    %c0_9 = arith.constant 0 : index
    %c0_10 = arith.constant 0 : index
    %8 = vector.load %arg5[%c0_9, %c0_10] : memref<1x32xf32, #tpu.memory_space<vmem>>, vector<1x32xf32>
    %9 = vector.broadcast %8 : vector<1x32xf32> to vector<8x32xf32>
    %10 = arith.addf %7, %9 : vector<8x32xf32>
    %11 = vector.shape_cast %10 : vector<8x32xf32> to vector<8x1x32xf32>
    %12 = vector.broadcast %11 : vector<8x1x32xf32> to vector<8x16x32xf32>
    %13 = arith.addf %4, %12 : vector<8x16x32xf32>
    %cst_11 = arith.constant 0.000000e+00 : f32
    %14 = vector.broadcast %cst_11 : f32 to vector<8x16x32xf32>
    %15 = arith.maximumf %13, %14 : vector<8x16x32xf32>
    %c0_12 = arith.constant 0 : index
    %c0_13 = arith.constant 0 : index
    %16 = vector.load %arg6[%c0_12, %c0_13] : memref<1x32xf32, #tpu.memory_space<vmem>>, vector<1x32xf32>
    %17 = vector.shape_cast %16 : vector<1x32xf32> to vector<1x1x32xf32>
    %18 = vector.broadcast %17 : vector<1x1x32xf32> to vector<8x16x32xf32>
    %19 = arith.mulf %15, %18 : vector<8x16x32xf32>
    %cst_14 = arith.constant dense<0.000000e+00> : vector<8x16xf32>
    %20 = vector.multi_reduction <add>, %19, %cst_14 [2] : vector<8x16x32xf32> to vector<8x16xf32>
    %cst_15 = arith.constant dense<0xFF800000> : vector<8xf32>
    %21 = vector.multi_reduction <maximumf>, %20, %cst_15 [1] : vector<8x16xf32> to vector<8xf32>
    %22 = vector.shape_cast %21 : vector<8xf32> to vector<8x1xf32>
    %23 = vector.broadcast %22 : vector<8x1xf32> to vector<8x16xf32>
    %24 = arith.subf %20, %23 : vector<8x16xf32>
    %25 = math.exp %24 : vector<8x16xf32>
    %cst_16 = arith.constant dense<0.000000e+00> : vector<8xf32>
    %26 = vector.multi_reduction <add>, %25, %cst_16 [1] : vector<8x16xf32> to vector<8xf32>
    %27 = vector.shape_cast %26 : vector<8xf32> to vector<8x1xf32>
    %28 = vector.broadcast %27 : vector<8x1xf32> to vector<8x16xf32>
    %29 = arith.divf %25, %28 : vector<8x16xf32>
    %30 = vector.shape_cast %29 : vector<8x16xf32> to vector<8x16x1xf32>
    %31 = vector.broadcast %30 : vector<8x16x1xf32> to vector<8x16x32xf32>
    %32 = arith.mulf %0, %31 : vector<8x16x32xf32>
    %cst_17 = arith.constant dense<0.000000e+00> : vector<8x32xf32>
    %33 = vector.multi_reduction <add>, %32, %cst_17 [1] : vector<8x16x32xf32> to vector<8x32xf32>
    %c0_18 = arith.constant 0 : index
    %c0_19 = arith.constant 0 : index
    %34 = vector.load %arg7[%c0_18, %c0_19] : memref<8x32xf32, #tpu.memory_space<vmem>>, vector<8x32xf32>
    tpu.vector_store %arg7[%c0_18, %c0_19], %33 {strides = array<i32>} : memref<8x32xf32, #tpu.memory_space<vmem>>, vector<8x32xf32>,
    %c0_20 = arith.constant 0 : index
    %c0_21 = arith.constant 0 : index
    %35 = vector.load %arg8[%c0_20, %c0_21] : memref<8x16xf32, #tpu.memory_space<vmem>>, vector<8x16xf32>
    tpu.vector_store %arg8[%c0_20, %c0_21], %29 {strides = array<i32>} : memref<8x16xf32, #tpu.memory_space<vmem>>, vector<8x16xf32>,
    return
  }
  func.func @transform_0(%arg0: i32) -> (i32, i32, i32) {
    %c0_i32 = arith.constant 0 : i32
    %c0_i32_0 = arith.constant 0 : i32
    %c0_i32_1 = arith.constant 0 : i32
    return %arg0, %c0_i32, %c0_i32_0 : i32, i32, i32
  }
  func.func @transform_1(%arg0: i32) -> (i32, i32) {
    %c0_i32 = arith.constant 0 : i32
    %c0_i32_0 = arith.constant 0 : i32
    return %arg0, %c0_i32 : i32, i32
  }
  func.func @transform_2(%arg0: i32) -> (i32, i32) {
    %c0_i32 = arith.constant 0 : i32
    %c0_i32_0 = arith.constant 0 : i32
    %c0_i32_1 = arith.constant 0 : i32
    return %c0_i32, %c0_i32_0 : i32, i32
  }
  func.func @transform_3(%arg0: i32) -> (i32, i32) {
    %c0_i32 = arith.constant 0 : i32
    %c0_i32_0 = arith.constant 0 : i32
    %c0_i32_1 = arith.constant 0 : i32
    return %c0_i32, %c0_i32_0 : i32, i32
  }
  func.func @transform_4(%arg0: i32) -> (i32, i32) {
    %c0_i32 = arith.constant 0 : i32
    %c0_i32_0 = arith.constant 0 : i32
    %c0_i32_1 = arith.constant 0 : i32
    return %c0_i32, %c0_i32_0 : i32, i32
  }
  func.func @transform_5(%arg0: i32) -> (i32, i32) {
    %c0_i32 = arith.constant 0 : i32
    %c0_i32_0 = arith.constant 0 : i32
    %c0_i32_1 = arith.constant 0 : i32
    return %c0_i32, %c0_i32_0 : i32, i32
  }
  func.func @transform_6(%arg0: i32) -> (i32, i32) {
    %c0_i32 = arith.constant 0 : i32
    %c0_i32_0 = arith.constant 0 : i32
    return %arg0, %c0_i32 : i32, i32
  }
  func.func @transform_7(%arg0: i32) -> (i32, i32) {
    %c0_i32 = arith.constant 0 : i32
    %c0_i32_0 = arith.constant 0 : i32
    return %arg0, %c0_i32 : i32, i32
  }
}

module attributes {stable_mosaic.version = 11 : i64} {
  func.func @attention_kernel(%arg0: i32, %arg1: memref<8x16x32xf32, #tpu.memory_space<vmem>>, %arg2: memref<8x32xf32, #tpu.memory_space<vmem>>, %arg3: memref<32x32xf32, #tpu.memory_space<vmem>>, %arg4: memref<32x32xf32, #tpu.memory_space<vmem>>, %arg5: memref<1x32xf32, #tpu.memory_space<vmem>>, %arg6: memref<1x32xf32, #tpu.memory_space<vmem>>, %arg7: memref<8x32xf32, #tpu.memory_space<vmem>>, %arg8: memref<8x16xf32, #tpu.memory_space<vmem>>) attributes {dimension_semantics = [#tpu.dimension_semantics<parallel>], iteration_bounds = array<i64: 1>, scalar_prefetch = 0 : i64, scratch_operands = 0 : i64, tpu.core_type = #tpu.core_type<tc>, window_params = [{transform_indices = @transform_0, window_bounds = array<i64: 8, 16, 32>}, {transform_indices = @transform_1, window_bounds = array<i64: 8, 32>}, {pipeline_mode = #tpu.pipeline_mode<synchronous>, transform_indices = @transform_2, window_bounds = array<i64: 32, 32>}, {pipeline_mode = #tpu.pipeline_mode<synchronous>, transform_indices = @transform_3, window_bounds = array<i64: 32, 32>}, {pipeline_mode = #tpu.pipeline_mode<synchronous>, transform_indices = @transform_4, window_bounds = array<i64: 1, 32>}, {pipeline_mode = #tpu.pipeline_mode<synchronous>, transform_indices = @transform_5, window_bounds = array<i64: 1, 32>}, {transform_indices = @transform_6, window_bounds = array<i64: 8, 32>}, {transform_indices = @transform_7, window_bounds = array<i64: 8, 16>}]} {
    %c0 = arith.constant 0 : index
    %c0_0 = arith.constant 0 : index
    %c0_1 = arith.constant 0 : index
    %0 = vector.load %arg1[%c0, %c0_0, %c0_1] : memref<8x16x32xf32, #tpu.memory_space<vmem>>, vector<8x16x32xf32>
    %1 = vector.shape_cast %0 : vector<8x16x32xf32> to vector<128x32xf32>
    %c0_2 = arith.constant 0 : index
    %c0_3 = arith.constant 0 : index
    %2 = vector.load %arg3[%c0_2, %c0_3] : memref<32x32xf32, #tpu.memory_space<vmem>>, vector<32x32xf32>
    %cst = arith.constant dense<0.000000e+00> : vector<128x32xf32>
    %3 = tpu.matmul %1, %2, %cst {dimension_numbers = #tpu.dot_dimension_numbers<[1], [0], [0], [1], [0, 0, 1, 1], [], []>} : vector<128x32xf32>, vector<32x32xf32>, vector<128x32xf32> -> vector<128x32xf32>
    %4 = vector.shape_cast %3 : vector<128x32xf32> to vector<8x16x32xf32>
    %c0_4 = arith.constant 0 : index
    %c0_5 = arith.constant 0 : index
    %5 = vector.load %arg2[%c0_4, %c0_5] : memref<8x32xf32, #tpu.memory_space<vmem>>, vector<8x32xf32>
    %c0_6 = arith.constant 0 : index
    %c0_7 = arith.constant 0 : index
    %6 = vector.load %arg4[%c0_6, %c0_7] : memref<32x32xf32, #tpu.memory_space<vmem>>, vector<32x32xf32>
    %cst_8 = arith.constant dense<0.000000e+00> : vector<8x32xf32>
    %7 = tpu.matmul %5, %6, %cst_8 {dimension_numbers = #tpu.dot_dimension_numbers<[1], [0], [0], [1], [0, 0, 1, 1], [], []>} : vector<8x32xf32>, vector<32x32xf32>, vector<8x32xf32> -> vector<8x32xf32>
    %c0_9 = arith.constant 0 : index
    %c0_10 = arith.constant 0 : index
    %8 = vector.load %arg5[%c0_9, %c0_10] : memref<1x32xf32, #tpu.memory_space<vmem>>, vector<1x32xf32>
    %9 = vector.broadcast %8 : vector<1x32xf32> to vector<8x32xf32>
    %10 = arith.addf %7, %9 : vector<8x32xf32>
    %11 = vector.shape_cast %10 : vector<8x32xf32> to vector<8x1x32xf32>
    %12 = vector.broadcast %11 : vector<8x1x32xf32> to vector<8x16x32xf32>
    %13 = arith.addf %4, %12 : vector<8x16x32xf32>
    %cst_11 = arith.constant 0.000000e+00 : f32
    %14 = vector.broadcast %cst_11 : f32 to vector<8x16x32xf32>
    %15 = arith.maximumf %13, %14 : vector<8x16x32xf32>
    %c0_12 = arith.constant 0 : index
    %c0_13 = arith.constant 0 : index
    %16 = vector.load %arg6[%c0_12, %c0_13] : memref<1x32xf32, #tpu.memory_space<vmem>>, vector<1x32xf32>
    %17 = vector.shape_cast %16 : vector<1x32xf32> to vector<1x1x32xf32>
    %18 = vector.broadcast %17 : vector<1x1x32xf32> to vector<8x16x32xf32>
    %19 = arith.mulf %15, %18 : vector<8x16x32xf32>
    %cst_14 = arith.constant dense<0.000000e+00> : vector<8x16xf32>
    %20 = vector.multi_reduction <add>, %19, %cst_14 [2] : vector<8x16x32xf32> to vector<8x16xf32>
    %cst_15 = arith.constant dense<0xFF800000> : vector<8xf32>
    %21 = vector.multi_reduction <maximumf>, %20, %cst_15 [1] : vector<8x16xf32> to vector<8xf32>
    %22 = vector.shape_cast %21 : vector<8xf32> to vector<8x1xf32>
    %23 = vector.broadcast %22 : vector<8x1xf32> to vector<8x16xf32>
    %24 = arith.subf %20, %23 : vector<8x16xf32>
    %25 = math.exp %24 : vector<8x16xf32>
    %cst_16 = arith.constant dense<0.000000e+00> : vector<8xf32>
    %26 = vector.multi_reduction <add>, %25, %cst_16 [1] : vector<8x16xf32> to vector<8xf32>
    %27 = vector.shape_cast %26 : vector<8xf32> to vector<8x1xf32>
    %28 = vector.broadcast %27 : vector<8x1xf32> to vector<8x16xf32>
    %29 = arith.divf %25, %28 : vector<8x16xf32>
    %30 = vector.shape_cast %29 : vector<8x16xf32> to vector<8x16x1xf32>
    %31 = vector.broadcast %30 : vector<8x16x1xf32> to vector<8x16x32xf32>
    %32 = arith.mulf %0, %31 : vector<8x16x32xf32>
    %cst_17 = arith.constant dense<0.000000e+00> : vector<8x32xf32>
    %33 = vector.multi_reduction <add>, %32, %cst_17 [1] : vector<8x16x32xf32> to vector<8x32xf32>
    %c0_18 = arith.constant 0 : index
    %c0_19 = arith.constant 0 : index
    %34 = vector.load %arg7[%c0_18, %c0_19] : memref<8x32xf32, #tpu.memory_space<vmem>>, vector<8x32xf32>
    tpu.vector_store %arg7[%c0_18, %c0_19], %33 {strides = array<i32>} : memref<8x32xf32, #tpu.memory_space<vmem>>, vector<8x32xf32>,
    %c0_20 = arith.constant 0 : index
    %c0_21 = arith.constant 0 : index
    %35 = vector.load %arg8[%c0_20, %c0_21] : memref<8x16xf32, #tpu.memory_space<vmem>>, vector<8x16xf32>
    tpu.vector_store %arg8[%c0_20, %c0_21], %29 {strides = array<i32>} : memref<8x16xf32, #tpu.memory_space<vmem>>, vector<8x16xf32>,
    return
  }
  func.func @transform_0(%arg0: i32) -> (i32, i32, i32) {
    %c0_i32 = arith.constant 0 : i32
    %c0_i32_0 = arith.constant 0 : i32
    %c0_i32_1 = arith.constant 0 : i32
    return %arg0, %c0_i32, %c0_i32_0 : i32, i32, i32
  }
  func.func @transform_1(%arg0: i32) -> (i32, i32) {
    %c0_i32 = arith.constant 0 : i32
    %c0_i32_0 = arith.constant 0 : i32
    return %arg0, %c0_i32 : i32, i32
  }
  func.func @transform_2(%arg0: i32) -> (i32, i32) {
    %c0_i32 = arith.constant 0 : i32
    %c0_i32_0 = arith.constant 0 : i32
    %c0_i32_1 = arith.constant 0 : i32
    return %c0_i32, %c0_i32_0 : i32, i32
  }
  func.func @transform_3(%arg0: i32) -> (i32, i32) {
    %c0_i32 = arith.constant 0 : i32
    %c0_i32_0 = arith.constant 0 : i32
    %c0_i32_1 = arith.constant 0 : i32
    return %c0_i32, %c0_i32_0 : i32, i32
  }
  func.func @transform_4(%arg0: i32) -> (i32, i32) {
    %c0_i32 = arith.constant 0 : i32
    %c0_i32_0 = arith.constant 0 : i32
    %c0_i32_1 = arith.constant 0 : i32
    return %c0_i32, %c0_i32_0 : i32, i32
  }
  func.func @transform_5(%arg0: i32) -> (i32, i32) {
    %c0_i32 = arith.constant 0 : i32
    %c0_i32_0 = arith.constant 0 : i32
    %c0_i32_1 = arith.constant 0 : i32
    return %c0_i32, %c0_i32_0 : i32, i32
  }
  func.func @transform_6(%arg0: i32) -> (i32, i32) {
    %c0_i32 = arith.constant 0 : i32
    %c0_i32_0 = arith.constant 0 : i32
    return %arg0, %c0_i32 : i32, i32
  }
  func.func @transform_7(%arg0: i32) -> (i32, i32) {
    %c0_i32 = arith.constant 0 : i32
    %c0_i32_0 = arith.constant 0 : i32
    return %arg0, %c0_i32 : i32, i32
  }
}

</mosaic_0001>

<llo_original>
// kernel: tpu_custom_call.1
$region0: #{tpu_custom_call.1}
  #allocation0 [shape = 'u32[]', space=smem, size = 0x4, offset = 0x4, fixed_abs, tag = 'smem constant byte address 0x4 - core index']
  #allocation1 [shape = 'u32[72,128]{1,0:T(1,128)}', space=vmem, size = 0x9000, scoped, tag = 'internal scratch']
  %s0 = inlined_call_operand.hbm [shape: f32[8,16,32], index: 0, kind: input, shape index: {}]
  %s1 = inlined_call_operand.hbm [shape: f32[8,32], index: 1, kind: input, shape index: {}]
  %s2 = inlined_call_operand.hbm [shape: f32[32,32], index: 2, kind: input, shape index: {}]
  %s3 = inlined_call_operand.hbm [shape: f32[32,32], index: 3, kind: input, shape index: {}]
  %s4 = inlined_call_operand.vmem [shape: f32[1,32], index: 4, kind: input, shape index: {}]
  %s5 = inlined_call_operand.vmem [shape: f32[1,32], index: 5, kind: input, shape index: {}]
  %s6 = inlined_call_operand.hbm [shape: f32[8,32], index: 6, kind: output, shape index: {0}]
  %s7 = inlined_call_operand.hbm [shape: f32[8,16], index: 7, kind: output, shape index: {1}]
  %8 = xla_tuple %s6, %s7
  %s9 = sld [smem:[#allocation0]]
  $region58: #{tpu_custom_call.1} parent=0
    _
  %s11 = ssub.s32 1, %s9
  %s12 = scalar_select 0, %s11, %s9
  $region1: #{tpu_custom_call.1} parent=0
    #allocation2 [shape = 'u8[65536]{0}', space=vmem, size = 0x10000, scoped, tag = 'input window, operand 0, single buffered']
    #allocation3 [shape = 's32[1]{0}', space=sflag, size = 0x4, scoped, tag = 'scoped memory for tpu_custom_call.1']
    #allocation4 [shape = 's32[1]{0}', space=sflag, size = 0x4, scoped, tag = 'scoped memory for tpu_custom_call.1']
    #allocation5 [shape = 'u8[4096]{0}', space=vmem, size = 0x1000, scoped, tag = 'input window, operand 1, single buffered']
    #allocation6 [shape = 's32[1]{0}', space=sflag, size = 0x4, scoped, tag = 'scoped memory for tpu_custom_call.1']
    #allocation7 [shape = 'u8[16384]{0}', space=vmem, size = 0x4000, scoped, tag = 'input window, operand 2, single buffered']
    #allocation8 [shape = 'u8[16384]{0}', space=vmem, size = 0x4000, scoped, tag = 'input window, operand 3, single buffered']
    #allocation9 [shape = 's32[1]{0}', space=sflag, size = 0x4, scoped, tag = 'scoped memory for tpu_custom_call.1']
    #allocation10 [shape = 'u8[4096]{0}', space=vmem, size = 0x1000, scoped, tag = 'output window, operand 0, single buffered']
    #allocation11 [shape = 'u8[4096]{0}', space=vmem, size = 0x1000, scoped, tag = 'output window, operand 1, single buffered']
    #allocation12 [shape = 's32[1]{0}', space=sflag, size = 0x4, scoped, tag = 'scoped memory for tpu_custom_call.1']
    %13 = vsyncpa [#allocation3], 0
    %14 = vsyncpa [#allocation6], 0
    %15 = vsyncpa [#allocation9], 0
    %16 = vsyncpa [#allocation4], 0
    %17 = vsyncpa [#allocation12], 0
    // Predicated region
    $region2: #{tpu_custom_call.1} parent=1 // pred_check
      _
    $region3: #{tpu_custom_call.1} parent=1 // pred_check_branch
      %19 = sbr.rel (0) target = $region5
    $region4: #{tpu_custom_call.1} parent=1 // pred_region
      %21 = vsyncadd [#allocation3], 0
      %s22 = sshll.u32 %s0, 4
      %s23 = int_to_ptr.hbm [resolvable:$true] %s22
      %s24 = sshll.u32 [#allocation2], 4
      %s25 = int_to_ptr.vmem [resolvable:$true] %s24
      %30 = dma.hbm_to_vmem [thread:$0]  %s23, 2048, %s25, [#allocation3], 128, 128, 8
    $region5: #{tpu_custom_call.1} parent=1 // pred_fallthru
      _
    // Predicated region
    $region6: #{tpu_custom_call.1} parent=1 // pred_check
      _
    $region7: #{tpu_custom_call.1} parent=1 // pred_check_branch
      %32 = sbr.rel (0) target = $region9
    $region8: #{tpu_custom_call.1} parent=1 // pred_region
      %34 = vsyncadd [#allocation6], 0
      %s36 = sshll.u32 %s1, 4
      %s37 = int_to_ptr.hbm [resolvable:$true] %s36
      %s38 = sshll.u32 [#allocation5], 4
      %s39 = int_to_ptr.vmem [resolvable:$true] %s38
      %41 = dma.hbm_to_vmem [thread:$0]  %s37, 128, %s39, [#allocation6]
    $region9: #{tpu_custom_call.1} parent=1 // pred_fallthru
      _
    // Predicated region
    $region10: #{tpu_custom_call.1} parent=1 // pred_check
      _
    $region11: #{tpu_custom_call.1} parent=1 // pred_check_branch
      %43 = sbr.rel (0) target = $region13
    $region12: #{tpu_custom_call.1} parent=1 // pred_region
      %45 = vsyncadd [#allocation6], 0
      %s46 = sshll.u32 %s2, 4
      %s47 = int_to_ptr.hbm [resolvable:$true] %s46
      %s48 = sshll.u32 [#allocation7], 4
      %s49 = int_to_ptr.vmem [resolvable:$true] %s48
      %54 = dma.hbm_to_vmem [thread:$0]  %s47, 512, %s49, [#allocation6], 128, 128, 8
    $region13: #{tpu_custom_call.1} parent=1 // pred_fallthru
      _
    // Predicated region
    $region14: #{tpu_custom_call.1} parent=1 // pred_check
      _
    $region15: #{tpu_custom_call.1} parent=1 // pred_check_branch
      %56 = sbr.rel (0) target = $region17
    $region16: #{tpu_custom_call.1} parent=1 // pred_region
      %58 = vsyncadd [#allocation9], 0
      %s59 = sshll.u32 %s3, 4
      %s60 = int_to_ptr.hbm [resolvable:$true] %s59
      %s61 = sshll.u32 [#allocation8], 4
      %s62 = int_to_ptr.vmem [resolvable:$true] %s61
      %67 = dma.hbm_to_vmem [thread:$0]  %s60, 512, %s62, [#allocation9], 128, 128, 8
    $region17: #{tpu_custom_call.1} parent=1 // pred_fallthru
      _
    // Predicated region
    $region18: #{tpu_custom_call.1} parent=1 // pred_check
      _
    $region19: #{tpu_custom_call.1} parent=1 // pred_check_branch
      %69 = sbr.rel (0) target = $region21
    $region20: #{tpu_custom_call.1} parent=1 // pred_region
      _
    $region21: #{tpu_custom_call.1} parent=1 // pred_fallthru
      _
    // Predicated region
    $region22: #{tpu_custom_call.1} parent=1 // pred_check
      _
    $region23: #{tpu_custom_call.1} parent=1 // pred_check_branch
      %71 = sbr.rel (0) target = $region25
    $region24: #{tpu_custom_call.1} parent=1 // pred_region
      _
    $region25: #{tpu_custom_call.1} parent=1 // pred_fallthru
      _
    // Predicated region
    $region26: #{tpu_custom_call.1} parent=1 // pred_check
      _
    $region27: #{tpu_custom_call.1} parent=1 // pred_check_branch
      %73 = sbr.rel (0) target = $region29
    $region28: #{tpu_custom_call.1} parent=1 // pred_region
      %75 = dma.done [#allocation3], 2048
    $region29: #{tpu_custom_call.1} parent=1 // pred_fallthru
      _
    // Predicated region
    $region30: #{tpu_custom_call.1} parent=1 // pred_check
      _
    $region31: #{tpu_custom_call.1} parent=1 // pred_check_branch
      %77 = sbr.rel (0) target = $region33
    $region32: #{tpu_custom_call.1} parent=1 // pred_region
      %79 = dma.done [#allocation6], 128
    $region33: #{tpu_custom_call.1} parent=1 // pred_fallthru
      _
    // Predicated region
    $region34: #{tpu_custom_call.1} parent=1 // pred_check
      _
    $region35: #{tpu_custom_call.1} parent=1 // pred_check_branch
      %81 = sbr.rel (0) target = $region37
    $region36: #{tpu_custom_call.1} parent=1 // pred_region
      %83 = dma.done [#allocation6], 512
    $region37: #{tpu_custom_call.1} parent=1 // pred_fallthru
      _
    // Predicated region
    $region38: #{tpu_custom_call.1} parent=1 // pred_check
      _
    $region39: #{tpu_custom_call.1} parent=1 // pred_check_branch
      %85 = sbr.rel (0) target = $region41
    $region40: #{tpu_custom_call.1} parent=1 // pred_region
      %87 = dma.done [#allocation9], 512
    $region41: #{tpu_custom_call.1} parent=1 // pred_fallthru
      _
    %v88 = vld [vmem:[#allocation2] sm:$0xff]
    %v89 = vld [vmem:[#allocation2 + $0x8] sm:$0xff]
    %v90 = vld [vmem:[#allocation2 + $0x10] sm:$0xff]
    %v91 = vld [vmem:[#allocation2 + $0x18] sm:$0xff]
    %v92 = vld [vmem:[#allocation2 + $0x20] sm:$0xff]
    %v93 = vld [vmem:[#allocation2 + $0x28] sm:$0xff]
    %v94 = vld [vmem:[#allocation2 + $0x30] sm:$0xff]
    %v95 = vld [vmem:[#allocation2 + $0x38] sm:$0xff]
    %v96 = vld [vmem:[#allocation2 + $0x40] sm:$0xff]
    %v97 = vld [vmem:[#allocation2 + $0x48] sm:$0xff]
    %v98 = vld [vmem:[#allocation2 + $0x50] sm:$0xff]
    %v99 = vld [vmem:[#allocation2 + $0x58] sm:$0xff]
    %v100 = vld [vmem:[#allocation2 + $0x60] sm:$0xff]
    %v101 = vld [vmem:[#allocation2 + $0x68] sm:$0xff]
    %v102 = vld [vmem:[#allocation2 + $0x70] sm:$0xff]
    %v103 = vld [vmem:[#allocation2 + $0x78] sm:$0xff]
    %v104 = vld [vmem:[#allocation7] sm:$0xff]
    %v105 = vld [vmem:[#allocation7 + $0x8] sm:$0xff]
    %v106 = vld [vmem:[#allocation7 + $0x10] sm:$0xff]
    %v107 = vld [vmem:[#allocation7 + $0x18] sm:$0xff]
    %vm108 = vcmask 261120
    %v110 = vsel %vm108, %v88, 0
    %v113 = vsel %vm108, %v89, 0
    %v116 = vsel %vm108, %v90, 0
    %v119 = vsel %vm108, %v91, 0
    %v122 = vsel %vm108, %v92, 0
    %v125 = vsel %vm108, %v93, 0
    %v128 = vsel %vm108, %v94, 0
    %v131 = vsel %vm108, %v95, 0
    %v134 = vsel %vm108, %v96, 0
    %v137 = vsel %vm108, %v97, 0
    %v140 = vsel %vm108, %v98, 0
    %v143 = vsel %vm108, %v99, 0
    %v146 = vsel %vm108, %v100, 0
    %v149 = vsel %vm108, %v101, 0
    %v152 = vsel %vm108, %v102, 0
    %v155 = vsel %vm108, %v103, 0
    %157 = vmatpush.msra.mxu0 0.0
    %158 = vmatpush.msra.mxu0 0.0
    %159 = vmatpush.msra.mxu0 0.0
    %160 = vmatpush.msra.mxu0 0.0
    %161 = vmatpush.msra.mxu0 0.0
    %162 = vmatpush.msra.mxu0 0.0
    %163 = vmatpush.msra.mxu0 0.0
    %164 = vmatpush.msra.mxu0 0.0
    %165 = vmatpush.msra.mxu0 0.0
    %166 = vmatpush.msra.mxu0 0.0
    %167 = vmatpush.msra.mxu0 0.0
    %168 = vmatpush.msra.mxu0 0.0
    %169 = vmatpush.msra.mxu0 %v107
    %170 = vmatpush.msra.mxu0 %v106
    %171 = vmatpush.msra.mxu0 %v105
    %172 = vmatpush.msra.mxu0 %v104
    %173 = vmatmul.f32.gmra.mxu0 %v110
    %v174 = vpop.f32.mrf.mxu0
    %v175 = vadd.f32 0.0, %v174
    %176 = vmatmul.f32.gmra.mxu0 %v113
    %v177 = vpop.f32.mrf.mxu0
    %v178 = vadd.f32 0.0, %v177
    %179 = vmatmul.f32.gmra.mxu0 %v116
    %v180 = vpop.f32.mrf.mxu0
    %v181 = vadd.f32 0.0, %v180
    %182 = vmatmul.f32.gmra.mxu0 %v119
    %v183 = vpop.f32.mrf.mxu0
    %v184 = vadd.f32 0.0, %v183
    %185 = vmatmul.f32.gmra.mxu0 %v122
    %v186 = vpop.f32.mrf.mxu0
    %v187 = vadd.f32 0.0, %v186
    %188 = vmatmul.f32.gmra.mxu0 %v125
    %v189 = vpop.f32.mrf.mxu0
    %v190 = vadd.f32 0.0, %v189
    %191 = vmatmul.f32.gmra.mxu0 %v128
    %v192 = vpop.f32.mrf.mxu0
    %v193 = vadd.f32 0.0, %v192
    %194 = vmatmul.f32.gmra.mxu0 %v131
    %v195 = vpop.f32.mrf.mxu0
    %v196 = vadd.f32 0.0, %v195
    %197 = vmatmul.f32.gmra.mxu0 %v134
    %v198 = vpop.f32.mrf.mxu0
    %v199 = vadd.f32 0.0, %v198
    %200 = vmatmul.f32.gmra.mxu0 %v137
    %v201 = vpop.f32.mrf.mxu0
    %v202 = vadd.f32 0.0, %v201
    %203 = vmatmul.f32.gmra.mxu0 %v140
    %v204 = vpop.f32.mrf.mxu0
    %v205 = vadd.f32 0.0, %v204
    %206 = vmatmul.f32.gmra.mxu0 %v143
    %v207 = vpop.f32.mrf.mxu0
    %v208 = vadd.f32 0.0, %v207
    %209 = vmatmul.f32.gmra.mxu0 %v146
    %v210 = vpop.f32.mrf.mxu0
    %v211 = vadd.f32 0.0, %v210
    %212 = vmatmul.f32.gmra.mxu0 %v149
    %v213 = vpop.f32.mrf.mxu0
    %v214 = vadd.f32 0.0, %v213
    %215 = vmatmul.f32.gmra.mxu0 %v152
    %v216 = vpop.f32.mrf.mxu0
    %v217 = vadd.f32 0.0, %v216
    %218 = vmatmul.f32.gmra.mxu0 %v155
    %v219 = vpop.f32.mrf.mxu0
    %v220 = vadd.f32 0.0, %v219
    %221 = vdwg.mxu0
    %v222 = vld [vmem:[#allocation5] sm:$0xff]
    %v223 = vld [vmem:[#allocation8] sm:$0xff]
    %v224 = vld [vmem:[#allocation8 + $0x8] sm:$0xff]
    %v225 = vld [vmem:[#allocation8 + $0x10] sm:$0xff]
    %v226 = vld [vmem:[#allocation8 + $0x18] sm:$0xff]
    %v227 = vld [vmem:[%s4] sm:$0x1]
    %v229 = vperm.slane %v227, 0
    %v232 = vsel %vm108, %v222, 0
    %234 = vmatpush.msra.mxu0 0.0
    %235 = vmatpush.msra.mxu0 0.0
    %236 = vmatpush.msra.mxu0 0.0
    %237 = vmatpush.msra.mxu0 0.0
    %238 = vmatpush.msra.mxu0 0.0
    %239 = vmatpush.msra.mxu0 0.0
    %240 = vmatpush.msra.mxu0 0.0
    %241 = vmatpush.msra.mxu0 0.0
    %242 = vmatpush.msra.mxu0 0.0
    %243 = vmatpush.msra.mxu0 0.0
    %244 = vmatpush.msra.mxu0 0.0
    %245 = vmatpush.msra.mxu0 0.0
    %246 = vmatpush.msra.mxu0 %v226
    %247 = vmatpush.msra.mxu0 %v225
    %248 = vmatpush.msra.mxu0 %v224
    %249 = vmatpush.msra.mxu0 %v223
    %250 = vmatmul.f32.gmra.mxu0 %v232
    %v251 = vpop.f32.mrf.mxu0
    %v252 = vadd.f32 %v229, %v251
    %253 = vdwg.mxu0
    %v255 = vrot.slane %v252, 1
    %v256 = vrot.slane %v252, 2
    %v257 = vrot.slane %v252, 3
    %v258 = vrot.slane %v252, 4
    %v259 = vrot.slane %v252, 5
    %v260 = vrot.slane %v252, 6
    %v261 = vrot.slane %v252, 7
    %v262 = vperm.slane %v252, 0
    %v263 = vperm.slane %v255, 0
    %v264 = vperm.slane %v256, 0
    %v265 = vperm.slane %v257, 0
    %v266 = vperm.slane %v258, 0
    %v267 = vperm.slane %v259, 0
    %v268 = vperm.slane %v260, 0
    %v269 = vperm.slane %v261, 0
    %v278 = vadd.f32 %v175, %v262
    %v279 = vadd.f32 %v178, %v262
    %v280 = vadd.f32 %v181, %v263
    %v281 = vadd.f32 %v184, %v263
    %v282 = vadd.f32 %v187, %v264
    %v283 = vadd.f32 %v190, %v264
    %v284 = vadd.f32 %v193, %v265
    %v285 = vadd.f32 %v196, %v265
    %v286 = vadd.f32 %v199, %v266
    %v287 = vadd.f32 %v202, %v266
    %v288 = vadd.f32 %v205, %v267
    %v289 = vadd.f32 %v208, %v267
    %v290 = vadd.f32 %v211, %v268
    %v291 = vadd.f32 %v214, %v268
    %v292 = vadd.f32 %v217, %v269
    %v293 = vadd.f32 %v220, %v269
    %v294 = vmax.f32 %v278, 0.0
    %v295 = vmax.f32 %v279, 0.0
    %v296 = vmax.f32 %v280, 0.0
    %v297 = vmax.f32 %v281, 0.0
    %v298 = vmax.f32 %v282, 0.0
    %v299 = vmax.f32 %v283, 0.0
    %v300 = vmax.f32 %v284, 0.0
    %v301 = vmax.f32 %v285, 0.0
    %v302 = vmax.f32 %v286, 0.0
    %v303 = vmax.f32 %v287, 0.0
    %v304 = vmax.f32 %v288, 0.0
    %v305 = vmax.f32 %v289, 0.0
    %v306 = vmax.f32 %v290, 0.0
    %v307 = vmax.f32 %v291, 0.0
    %v308 = vmax.f32 %v292, 0.0
    %v309 = vmax.f32 %v293, 0.0
    %v310 = vld [vmem:[%s5] sm:$0x1]
    %v312 = vperm.slane %v310, 0
    %v314 = vmul.f32 %v294, %v312
    %v315 = vmul.f32 %v295, %v312
    %v316 = vmul.f32 %v296, %v312
    %v317 = vmul.f32 %v297, %v312
    %v318 = vmul.f32 %v298, %v312
    %v319 = vmul.f32 %v299, %v312
    %v320 = vmul.f32 %v300, %v312
    %v321 = vmul.f32 %v301, %v312
    %v322 = vmul.f32 %v302, %v312
    %v323 = vmul.f32 %v303, %v312
    %v324 = vmul.f32 %v304, %v312
    %v325 = vmul.f32 %v305, %v312
    %v326 = vmul.f32 %v306, %v312
    %v327 = vmul.f32 %v307, %v312
    %v328 = vmul.f32 %v308, %v312
    %v329 = vmul.f32 %v309, %v312
    %v330 = vsel %vm108, %v314, 0.0
    %331 = vadd.xlane.f32.xlu0 %v330
    %v332 = vpop.xlane.xlu0 %331
    %v333 = vsel %vm108, %v315, 0.0
    %334 = vadd.xlane.f32.xlu0 %v333
    %v335 = vpop.xlane.xlu0 %334
    %v336 = vsel %vm108, %v316, 0.0
    %337 = vadd.xlane.f32.xlu0 %v336
    %v338 = vpop.xlane.xlu0 %337
    %v339 = vsel %vm108, %v317, 0.0
    %340 = vadd.xlane.f32.xlu0 %v339
    %v341 = vpop.xlane.xlu0 %340
    %v342 = vsel %vm108, %v318, 0.0
    %343 = vadd.xlane.f32.xlu0 %v342
    %v344 = vpop.xlane.xlu0 %343
    %v345 = vsel %vm108, %v319, 0.0
    %346 = vadd.xlane.f32.xlu0 %v345
    %v347 = vpop.xlane.xlu0 %346
    %v348 = vsel %vm108, %v320, 0.0
    %349 = vadd.xlane.f32.xlu0 %v348
    %v350 = vpop.xlane.xlu0 %349
    %v351 = vsel %vm108, %v321, 0.0
    %352 = vadd.xlane.f32.xlu0 %v351
    %v353 = vpop.xlane.xlu0 %352
    %v354 = vsel %vm108, %v322, 0.0
    %355 = vadd.xlane.f32.xlu0 %v354
    %v356 = vpop.xlane.xlu0 %355
    %v357 = vsel %vm108, %v323, 0.0
    %358 = vadd.xlane.f32.xlu0 %v357
    %v359 = vpop.xlane.xlu0 %358
    %v360 = vsel %vm108, %v324, 0.0
    %361 = vadd.xlane.f32.xlu0 %v360
    %v362 = vpop.xlane.xlu0 %361
    %v363 = vsel %vm108, %v325, 0.0
    %364 = vadd.xlane.f32.xlu0 %v363
    %v365 = vpop.xlane.xlu0 %364
    %v366 = vsel %vm108, %v326, 0.0
    %367 = vadd.xlane.f32.xlu0 %v366
    %v368 = vpop.xlane.xlu0 %367
    %v369 = vsel %vm108, %v327, 0.0
    %370 = vadd.xlane.f32.xlu0 %v369
    %v371 = vpop.xlane.xlu0 %370
    %v372 = vsel %vm108, %v328, 0.0
    %373 = vadd.xlane.f32.xlu0 %v372
    %v374 = vpop.xlane.xlu0 %373
    %v375 = vsel %vm108, %v329, 0.0
    %376 = vadd.xlane.f32.xlu0 %v375
    %v377 = vpop.xlane.xlu0 %376
    %v394 = vlaneseq
    %v395 = vand.u32 %v394, 127
    %v396 = vperm.slane %v332, %v395
    %v397 = vadd.s32 %v395, 4294967288
    %v398 = vperm.slane %v335, %v397
    %vm399 = vcmask 130112
    %v400 = vsel %vm399, %v398, %v396
    %v401 = vperm.slane %v338, %v395
    %v402 = vperm.slane %v341, %v397
    %v403 = vsel %vm399, %v402, %v401
    %v404 = vperm.slane %v344, %v395
    %v405 = vperm.slane %v347, %v397
    %v406 = vsel %vm399, %v405, %v404
    %v407 = vperm.slane %v350, %v395
    %v408 = vperm.slane %v353, %v397
    %v409 = vsel %vm399, %v408, %v407
    %v410 = vperm.slane %v356, %v395
    %v411 = vperm.slane %v359, %v397
    %v412 = vsel %vm399, %v411, %v410
    %v413 = vperm.slane %v362, %v395
    %v414 = vperm.slane %v365, %v397
    %v415 = vsel %vm399, %v414, %v413
    %v416 = vperm.slane %v368, %v395
    %v417 = vperm.slane %v371, %v397
    %v418 = vsel %vm399, %v417, %v416
    %v419 = vperm.slane %v374, %v395
    %v420 = vperm.slane %v377, %v397
    %v421 = vsel %vm399, %v420, %v419
    %vm422 = vcmask 1041409
    %v423 = vsel %vm422, %v403, %v400
    %vm424 = vcmask 1042434
    %v425 = vsel %vm424, %v406, %v423
    %vm426 = vcmask 1043459
    %v427 = vsel %vm426, %v409, %v425
    %vm428 = vcmask 1044484
    %v429 = vsel %vm428, %v412, %v427
    %vm430 = vcmask 1045509
    %v431 = vsel %vm430, %v415, %v429
    %vm432 = vcmask 1046534
    %v433 = vsel %vm432, %v418, %v431
    %vm434 = vcmask 1047559
    %v435 = vsel %vm434, %v421, %v433
    %vm437 = vcmask 130048
    %v438 = vsel %vm437, %v435, -inf
    %439 = vmax.xlane.f32.xlu0 %v438
    %v440 = vpop.xlane.xlu0 %439
    %v442 = vperm.slane %v440, 0
    %v443 = vperm.slane %v440, 1
    %v444 = vperm.slane %v440, 2
    %v445 = vperm.slane %v440, 3
    %v446 = vperm.slane %v440, 4
    %v447 = vperm.slane %v440, 5
    %v448 = vperm.slane %v440, 6
    %v449 = vperm.slane %v440, 7
    %v458 = vsub.f32 %v332, %v442
    %v459 = vsub.f32 %v335, %v442
    %v460 = vsub.f32 %v338, %v443
    %v461 = vsub.f32 %v341, %v443
    %v462 = vsub.f32 %v344, %v444
    %v463 = vsub.f32 %v347, %v444
    %v464 = vsub.f32 %v350, %v445
    %v465 = vsub.f32 %v353, %v445
    %v466 = vsub.f32 %v356, %v446
    %v467 = vsub.f32 %v359, %v446
    %v468 = vsub.f32 %v362, %v447
    %v469 = vsub.f32 %v365, %v447
    %v470 = vsub.f32 %v368, %v448
    %v471 = vsub.f32 %v371, %v448
    %v472 = vsub.f32 %v374, %v449
    %v473 = vsub.f32 %v377, %v449
    %v474 = vmul.f32 %v458, 1.442695
    %v475 = vpow.pop %v474
    %v476 = vmul.f32 %v459, 1.442695
    %v477 = vpow.pop %v476
    %v478 = vmul.f32 %v460, 1.442695
    %v479 = vpow.pop %v478
    %v480 = vmul.f32 %v461, 1.442695
    %v481 = vpow.pop %v480
    %v482 = vmul.f32 %v462, 1.442695
    %v483 = vpow.pop %v482
    %v484 = vmul.f32 %v463, 1.442695
    %v485 = vpow.pop %v484
    %v486 = vmul.f32 %v464, 1.442695
    %v487 = vpow.pop %v486
    %v488 = vmul.f32 %v465, 1.442695
    %v489 = vpow.pop %v488
    %v490 = vmul.f32 %v466, 1.442695
    %v491 = vpow.pop %v490
    %v492 = vmul.f32 %v467, 1.442695
    %v493 = vpow.pop %v492
    %v494 = vmul.f32 %v468, 1.442695
    %v495 = vpow.pop %v494
    %v496 = vmul.f32 %v469, 1.442695
    %v497 = vpow.pop %v496
    %v498 = vmul.f32 %v470, 1.442695
    %v499 = vpow.pop %v498
    %v500 = vmul.f32 %v471, 1.442695
    %v501 = vpow.pop %v500
    %v502 = vmul.f32 %v472, 1.442695
    %v503 = vpow.pop %v502
    %v504 = vmul.f32 %v473, 1.442695
    %v505 = vpow.pop %v504
    %522 = vset.pattern.permute.xlu0 0
    %523 = vperm.xlu0 %522, %v475
    %v524 = vpop.permute.xlu0 %523
    %525 = vset.pattern.permute.xlu0 0
    %526 = vperm.xlu0 %525, %v477
    %v527 = vpop.permute.xlu0 %526
    %528 = vset.pattern.permute.xlu0 0
    %529 = vperm.xlu0 %528, %v479
    %v530 = vpop.permute.xlu0 %529
    %531 = vset.pattern.permute.xlu0 0
    %532 = vperm.xlu0 %531, %v481
    %v533 = vpop.permute.xlu0 %532
    %534 = vset.pattern.permute.xlu0 0
    %535 = vperm.xlu0 %534, %v483
    %v536 = vpop.permute.xlu0 %535
    %537 = vset.pattern.permute.xlu0 0
    %538 = vperm.xlu0 %537, %v485
    %v539 = vpop.permute.xlu0 %538
    %540 = vset.pattern.permute.xlu0 0
    %541 = vperm.xlu0 %540, %v487
    %v542 = vpop.permute.xlu0 %541
    %543 = vset.pattern.permute.xlu0 0
    %544 = vperm.xlu0 %543, %v489
    %v545 = vpop.permute.xlu0 %544
    %546 = vset.pattern.permute.xlu0 0
    %547 = vperm.xlu0 %546, %v491
    %v548 = vpop.permute.xlu0 %547
    %549 = vset.pattern.permute.xlu0 0
    %550 = vperm.xlu0 %549, %v493
    %v551 = vpop.permute.xlu0 %550
    %552 = vset.pattern.permute.xlu0 0
    %553 = vperm.xlu0 %552, %v495
    %v554 = vpop.permute.xlu0 %553
    %555 = vset.pattern.permute.xlu0 0
    %556 = vperm.xlu0 %555, %v497
    %v557 = vpop.permute.xlu0 %556
    %558 = vset.pattern.permute.xlu0 0
    %559 = vperm.xlu0 %558, %v499
    %v560 = vpop.permute.xlu0 %559
    %561 = vset.pattern.permute.xlu0 0
    %562 = vperm.xlu0 %561, %v501
    %v563 = vpop.permute.xlu0 %562
    %564 = vset.pattern.permute.xlu0 0
    %565 = vperm.xlu0 %564, %v503
    %v566 = vpop.permute.xlu0 %565
    %567 = vset.pattern.permute.xlu0 0
    %568 = vperm.xlu0 %567, %v505
    %v569 = vpop.permute.xlu0 %568
    %v570 = vperm.slane %v524, %v395
    %v571 = vperm.slane %v527, %v397
    %v572 = vsel %vm399, %v571, %v570
    %v573 = vperm.slane %v530, %v395
    %v574 = vperm.slane %v533, %v397
    %v575 = vsel %vm399, %v574, %v573
    %v576 = vperm.slane %v536, %v395
    %v577 = vperm.slane %v539, %v397
    %v578 = vsel %vm399, %v577, %v576
    %v579 = vperm.slane %v542, %v395
    %v580 = vperm.slane %v545, %v397
    %v581 = vsel %vm399, %v580, %v579
    %v582 = vperm.slane %v548, %v395
    %v583 = vperm.slane %v551, %v397
    %v584 = vsel %vm399, %v583, %v582
    %v585 = vperm.slane %v554, %v395
    %v586 = vperm.slane %v557, %v397
    %v587 = vsel %vm399, %v586, %v585
    %v588 = vperm.slane %v560, %v395
    %v589 = vperm.slane %v563, %v397
    %v590 = vsel %vm399, %v589, %v588
    %v591 = vperm.slane %v566, %v395
    %v592 = vperm.slane %v569, %v397
    %v593 = vsel %vm399, %v592, %v591
    %v594 = vsel %vm422, %v575, %v572
    %v595 = vsel %vm424, %v578, %v594
    %v596 = vsel %vm426, %v581, %v595
    %v597 = vsel %vm428, %v584, %v596
    %v598 = vsel %vm430, %v587, %v597
    %v599 = vsel %vm432, %v590, %v598
    %v600 = vsel %vm434, %v593, %v599
    %v602 = vsel %vm437, %v600, 0.0
    %603 = vadd.xlane.f32.xlu0 %v602
    %v604 = vpop.xlane.xlu0 %603
    %v606 = vperm.slane %v604, 0
    %v607 = vperm.slane %v604, 1
    %v608 = vperm.slane %v604, 2
    %v609 = vperm.slane %v604, 3
    %v610 = vperm.slane %v604, 4
    %v611 = vperm.slane %v604, 5
    %v612 = vperm.slane %v604, 6
    %v613 = vperm.slane %v604, 7
    %v622 = vrcp.pop %v606
    %v623 = vmul.f32 %v606, %v622
    %v624 = vsub.f32 1.0, %v623
    %v625 = vmul.f32 %v622, %v624
    %v626 = vadd.f32 %v622, %v625
    %vm627 = vweird.f32 %v606
    %vm628 = vweird.f32 %v622
    %vm629 = vmor %vm627, %vm628
    %v630 = vsel %vm629, %v622, %v626
    %v631 = vand.u32 2147483647, %v606
    %vm632 = vcmp.eq.f32.partialorder %v631, 8.507059e+37
    %v633 = vand.u32 %v606, 2147483648
    %v634 = vor.u32 1.1754944e-38, %v633
    %v635 = vsel %vm632, %v634, %v630
    %v636 = vmul.f32 %v475, %v635
    %v637 = vmul.f32 %v477, %v635
    %v638 = vrcp.pop %v607
    %v639 = vmul.f32 %v607, %v638
    %v640 = vsub.f32 1.0, %v639
    %v641 = vmul.f32 %v638, %v640
    %v642 = vadd.f32 %v638, %v641
    %vm643 = vweird.f32 %v607
    %vm644 = vweird.f32 %v638
    %vm645 = vmor %vm643, %vm644
    %v646 = vsel %vm645, %v638, %v642
    %v647 = vand.u32 2147483647, %v607
    %vm648 = vcmp.eq.f32.partialorder %v647, 8.507059e+37
    %v649 = vand.u32 %v607, 2147483648
    %v650 = vor.u32 1.1754944e-38, %v649
    %v651 = vsel %vm648, %v650, %v646
    %v652 = vmul.f32 %v479, %v651
    %v653 = vmul.f32 %v481, %v651
    %v654 = vrcp.pop %v608
    %v655 = vmul.f32 %v608, %v654
    %v656 = vsub.f32 1.0, %v655
    %v657 = vmul.f32 %v654, %v656
    %v658 = vadd.f32 %v654, %v657
    %vm659 = vweird.f32 %v608
    %vm660 = vweird.f32 %v654
    %vm661 = vmor %vm659, %vm660
    %v662 = vsel %vm661, %v654, %v658
    %v663 = vand.u32 2147483647, %v608
    %vm664 = vcmp.eq.f32.partialorder %v663, 8.507059e+37
    %v665 = vand.u32 %v608, 2147483648
    %v666 = vor.u32 1.1754944e-38, %v665
    %v667 = vsel %vm664, %v666, %v662
    %v668 = vmul.f32 %v483, %v667
    %v669 = vmul.f32 %v485, %v667
    %v670 = vrcp.pop %v609
    %v671 = vmul.f32 %v609, %v670
    %v672 = vsub.f32 1.0, %v671
    %v673 = vmul.f32 %v670, %v672
    %v674 = vadd.f32 %v670, %v673
    %vm675 = vweird.f32 %v609
    %vm676 = vweird.f32 %v670
    %vm677 = vmor %vm675, %vm676
    %v678 = vsel %vm677, %v670, %v674
    %v679 = vand.u32 2147483647, %v609
    %vm680 = vcmp.eq.f32.partialorder %v679, 8.507059e+37
    %v681 = vand.u32 %v609, 2147483648
    %v682 = vor.u32 1.1754944e-38, %v681
    %v683 = vsel %vm680, %v682, %v678
    %v684 = vmul.f32 %v487, %v683
    %v685 = vmul.f32 %v489, %v683
    %v686 = vrcp.pop %v610
    %v687 = vmul.f32 %v610, %v686
    %v688 = vsub.f32 1.0, %v687
    %v689 = vmul.f32 %v686, %v688
    %v690 = vadd.f32 %v686, %v689
    %vm691 = vweird.f32 %v610
    %vm692 = vweird.f32 %v686
    %vm693 = vmor %vm691, %vm692
    %v694 = vsel %vm693, %v686, %v690
    %v695 = vand.u32 2147483647, %v610
    %vm696 = vcmp.eq.f32.partialorder %v695, 8.507059e+37
    %v697 = vand.u32 %v610, 2147483648
    %v698 = vor.u32 1.1754944e-38, %v697
    %v699 = vsel %vm696, %v698, %v694
    %v700 = vmul.f32 %v491, %v699
    %v701 = vmul.f32 %v493, %v699
    %v702 = vrcp.pop %v611
    %v703 = vmul.f32 %v611, %v702
    %v704 = vsub.f32 1.0, %v703
    %v705 = vmul.f32 %v702, %v704
    %v706 = vadd.f32 %v702, %v705
    %vm707 = vweird.f32 %v611
    %vm708 = vweird.f32 %v702
    %vm709 = vmor %vm707, %vm708
    %v710 = vsel %vm709, %v702, %v706
    %v711 = vand.u32 2147483647, %v611
    %vm712 = vcmp.eq.f32.partialorder %v711, 8.507059e+37
    %v713 = vand.u32 %v611, 2147483648
    %v714 = vor.u32 1.1754944e-38, %v713
    %v715 = vsel %vm712, %v714, %v710
    %v716 = vmul.f32 %v495, %v715
    %v717 = vmul.f32 %v497, %v715
    %v718 = vrcp.pop %v612
    %v719 = vmul.f32 %v612, %v718
    %v720 = vsub.f32 1.0, %v719
    %v721 = vmul.f32 %v718, %v720
    %v722 = vadd.f32 %v718, %v721
    %vm723 = vweird.f32 %v612
    %vm724 = vweird.f32 %v718
    %vm725 = vmor %vm723, %vm724
    %v726 = vsel %vm725, %v718, %v722
    %v727 = vand.u32 2147483647, %v612
    %vm728 = vcmp.eq.f32.partialorder %v727, 8.507059e+37
    %v729 = vand.u32 %v612, 2147483648
    %v730 = vor.u32 1.1754944e-38, %v729
    %v731 = vsel %vm728, %v730, %v726
    %v732 = vmul.f32 %v499, %v731
    %v733 = vmul.f32 %v501, %v731
    %v734 = vrcp.pop %v613
    %v735 = vmul.f32 %v613, %v734
    %v736 = vsub.f32 1.0, %v735
    %v737 = vmul.f32 %v734, %v736
    %v738 = vadd.f32 %v734, %v737
    %vm739 = vweird.f32 %v613
    %vm740 = vweird.f32 %v734
    %vm741 = vmor %vm739, %vm740
    %v742 = vsel %vm741, %v734, %v738
    %v743 = vand.u32 2147483647, %v613
    %vm744 = vcmp.eq.f32.partialorder %v743, 8.507059e+37
    %v745 = vand.u32 %v613, 2147483648
    %v746 = vor.u32 1.1754944e-38, %v745
    %v747 = vsel %vm744, %v746, %v742
    %v748 = vmul.f32 %v503, %v747
    %v749 = vmul.f32 %v505, %v747
    %751 = vset.pattern.permute.xlu0 0
    %752 = vperm.xlu0 %751, %v636
    %v753 = vpop.permute.xlu0 %752
    %756 = vset.pattern.permute.xlu0 0
    %757 = vperm.xlu0 %756, %v637
    %v758 = vpop.permute.xlu0 %757
    %761 = vset.pattern.permute.xlu0 0
    %762 = vperm.xlu0 %761, %v652
    %v763 = vpop.permute.xlu0 %762
    %766 = vset.pattern.permute.xlu0 0
    %767 = vperm.xlu0 %766, %v653
    %v768 = vpop.permute.xlu0 %767
    %771 = vset.pattern.permute.xlu0 0
    %772 = vperm.xlu0 %771, %v668
    %v773 = vpop.permute.xlu0 %772
    %776 = vset.pattern.permute.xlu0 0
    %777 = vperm.xlu0 %776, %v669
    %v778 = vpop.permute.xlu0 %777
    %781 = vset.pattern.permute.xlu0 0
    %782 = vperm.xlu0 %781, %v684
    %v783 = vpop.permute.xlu0 %782
    %786 = vset.pattern.permute.xlu0 0
    %787 = vperm.xlu0 %786, %v685
    %v788 = vpop.permute.xlu0 %787
    %791 = vset.pattern.permute.xlu0 0
    %792 = vperm.xlu0 %791, %v700
    %v793 = vpop.permute.xlu0 %792
    %796 = vset.pattern.permute.xlu0 0
    %797 = vperm.xlu0 %796, %v701
    %v798 = vpop.permute.xlu0 %797
    %801 = vset.pattern.permute.xlu0 0
    %802 = vperm.xlu0 %801, %v716
    %v803 = vpop.permute.xlu0 %802
    %806 = vset.pattern.permute.xlu0 0
    %807 = vperm.xlu0 %806, %v717
    %v808 = vpop.permute.xlu0 %807
    %811 = vset.pattern.permute.xlu0 0
    %812 = vperm.xlu0 %811, %v732
    %v813 = vpop.permute.xlu0 %812
    %816 = vset.pattern.permute.xlu0 0
    %817 = vperm.xlu0 %816, %v733
    %v818 = vpop.permute.xlu0 %817
    %821 = vset.pattern.permute.xlu0 0
    %822 = vperm.xlu0 %821, %v748
    %v823 = vpop.permute.xlu0 %822
    %826 = vset.pattern.permute.xlu0 0
    %827 = vperm.xlu0 %826, %v749
    %v828 = vpop.permute.xlu0 %827
    %v830 = vmul.f32 %v88, %v753
    %v831 = vmul.f32 %v89, %v758
    %v832 = vmul.f32 %v90, %v763
    %v833 = vmul.f32 %v91, %v768
    %v834 = vmul.f32 %v92, %v773
    %v835 = vmul.f32 %v93, %v778
    %v836 = vmul.f32 %v94, %v783
    %v837 = vmul.f32 %v95, %v788
    %v838 = vmul.f32 %v96, %v793
    %v839 = vmul.f32 %v97, %v798
    %v840 = vmul.f32 %v98, %v803
    %v841 = vmul.f32 %v99, %v808
    %v842 = vmul.f32 %v100, %v813
    %v843 = vmul.f32 %v101, %v818
    %v844 = vmul.f32 %v102, %v823
    %v845 = vmul.f32 %v103, %v828
    %v846 = vsel %vm108, %v830, 0.0
    %v847 = vsel %vm108, %v831, 0.0
    %v848 = vadd.f32 %v846, %v847
    %v849 = vrot.slane %v848, 4
    %v850 = vadd.f32 %v848, %v849
    %v851 = vrot.slane %v850, 2
    %v852 = vadd.f32 %v850, %v851
    %v853 = vrot.slane %v852, 1
    %v854 = vadd.f32 %v852, %v853
    %v855 = vsel %vm108, %v832, 0.0
    %v856 = vsel %vm108, %v833, 0.0
    %v857 = vadd.f32 %v855, %v856
    %v858 = vrot.slane %v857, 4
    %v859 = vadd.f32 %v857, %v858
    %v860 = vrot.slane %v859, 2
    %v861 = vadd.f32 %v859, %v860
    %v862 = vrot.slane %v861, 1
    %v863 = vadd.f32 %v861, %v862
    %v864 = vsel %vm108, %v834, 0.0
    %v865 = vsel %vm108, %v835, 0.0
    %v866 = vadd.f32 %v864, %v865
    %v867 = vrot.slane %v866, 4
    %v868 = vadd.f32 %v866, %v867
    %v869 = vrot.slane %v868, 2
    %v870 = vadd.f32 %v868, %v869
    %v871 = vrot.slane %v870, 1
    %v872 = vadd.f32 %v870, %v871
    %v873 = vsel %vm108, %v836, 0.0
    %v874 = vsel %vm108, %v837, 0.0
    %v875 = vadd.f32 %v873, %v874
    %v876 = vrot.slane %v875, 4
    %v877 = vadd.f32 %v875, %v876
    %v878 = vrot.slane %v877, 2
    %v879 = vadd.f32 %v877, %v878
    %v880 = vrot.slane %v879, 1
    %v881 = vadd.f32 %v879, %v880
    %v882 = vsel %vm108, %v838, 0.0
    %v883 = vsel %vm108, %v839, 0.0
    %v884 = vadd.f32 %v882, %v883
    %v885 = vrot.slane %v884, 4
    %v886 = vadd.f32 %v884, %v885
    %v887 = vrot.slane %v886, 2
    %v888 = vadd.f32 %v886, %v887
    %v889 = vrot.slane %v888, 1
    %v890 = vadd.f32 %v888, %v889
    %v891 = vsel %vm108, %v840, 0.0
    %v892 = vsel %vm108, %v841, 0.0
    %v893 = vadd.f32 %v891, %v892
    %v894 = vrot.slane %v893, 4
    %v895 = vadd.f32 %v893, %v894
    %v896 = vrot.slane %v895, 2
    %v897 = vadd.f32 %v895, %v896
    %v898 = vrot.slane %v897, 1
    %v899 = vadd.f32 %v897, %v898
    %v900 = vsel %vm108, %v842, 0.0
    %v901 = vsel %vm108, %v843, 0.0
    %v902 = vadd.f32 %v900, %v901
    %v903 = vrot.slane %v902, 4
    %v904 = vadd.f32 %v902, %v903
    %v905 = vrot.slane %v904, 2
    %v906 = vadd.f32 %v904, %v905
    %v907 = vrot.slane %v906, 1
    %v908 = vadd.f32 %v906, %v907
    %v909 = vsel %vm108, %v844, 0.0
    %v910 = vsel %vm108, %v845, 0.0
    %v911 = vadd.f32 %v909, %v910
    %v912 = vrot.slane %v911, 4
    %v913 = vadd.f32 %v911, %v912
    %v914 = vrot.slane %v913, 2
    %v915 = vadd.f32 %v913, %v914
    %v916 = vrot.slane %v915, 1
    %v917 = vadd.f32 %v915, %v916
    %v926 = vsel %vm422, %v863, %v854
    %v927 = vsel %vm424, %v872, %v926
    %v928 = vsel %vm426, %v881, %v927
    %v929 = vsel %vm428, %v890, %v928
    %v930 = vsel %vm430, %v899, %v929
    %v931 = vsel %vm432, %v908, %v930
    %v932 = vsel %vm434, %v917, %v931
    %934 = vst.msk [vmem:[#allocation10] sm:$0xff] %vm108, %v932
    %v935 = vperm.slane %v753, %v395
    %v936 = vperm.slane %v758, %v397
    %v937 = vsel %vm399, %v936, %v935
    %v938 = vperm.slane %v763, %v395
    %v939 = vperm.slane %v768, %v397
    %v940 = vsel %vm399, %v939, %v938
    %v941 = vperm.slane %v773, %v395
    %v942 = vperm.slane %v778, %v397
    %v943 = vsel %vm399, %v942, %v941
    %v944 = vperm.slane %v783, %v395
    %v945 = vperm.slane %v788, %v397
    %v946 = vsel %vm399, %v945, %v944
    %v947 = vperm.slane %v793, %v395
    %v948 = vperm.slane %v798, %v397
    %v949 = vsel %vm399, %v948, %v947
    %v950 = vperm.slane %v803, %v395
    %v951 = vperm.slane %v808, %v397
    %v952 = vsel %vm399, %v951, %v950
    %v953 = vperm.slane %v813, %v395
    %v954 = vperm.slane %v818, %v397
    %v955 = vsel %vm399, %v954, %v953
    %v956 = vperm.slane %v823, %v395
    %v957 = vperm.slane %v828, %v397
    %v958 = vsel %vm399, %v957, %v956
    %v959 = vsel %vm422, %v940, %v937
    %v960 = vsel %vm424, %v943, %v959
    %v961 = vsel %vm426, %v946, %v960
    %v962 = vsel %vm428, %v949, %v961
    %v963 = vsel %vm430, %v952, %v962
    %v964 = vsel %vm432, %v955, %v963
    %v965 = vsel %vm434, %v958, %v964
    %967 = vst.msk [vmem:[#allocation11] sm:$0xff] %vm437, %v965
    // Predicated region
    $region42: #{tpu_custom_call.1} parent=1 // pred_check
      _
    $region43: #{tpu_custom_call.1} parent=1 // pred_check_branch
      %969 = sbr.rel (0) target = $region45
    $region44: #{tpu_custom_call.1} parent=1 // pred_region
      %971 = vsyncadd [#allocation4], 0
      %s973 = sshll.u32 [#allocation10], 4
      %s974 = int_to_ptr.vmem [resolvable:$true] %s973
      %s975 = sshll.u32 %s6, 4
      %s976 = int_to_ptr.hbm [resolvable:$true] %s975
      %978 = dma.vmem_to_hbm [thread:$0]  %s974, 128, %s976, [#allocation4]
    $region45: #{tpu_custom_call.1} parent=1 // pred_fallthru
      _
    // Predicated region
    $region46: #{tpu_custom_call.1} parent=1 // pred_check
      _
    $region47: #{tpu_custom_call.1} parent=1 // pred_check_branch
      %980 = sbr.rel (0) target = $region49
    $region48: #{tpu_custom_call.1} parent=1 // pred_region
      %982 = vsyncadd [#allocation12], 0
      %s984 = sshll.u32 [#allocation11], 4
      %s985 = int_to_ptr.vmem [resolvable:$true] %s984
      %s986 = sshll.u32 %s7, 4
      %s987 = int_to_ptr.hbm [resolvable:$true] %s986
      %989 = dma.vmem_to_hbm [thread:$0]  %s985, 128, %s987, [#allocation12]
    $region49: #{tpu_custom_call.1} parent=1 // pred_fallthru
      _
    // Predicated region
    $region50: #{tpu_custom_call.1} parent=1 // pred_check
      _
    $region51: #{tpu_custom_call.1} parent=1 // pred_check_branch
      %991 = sbr.rel (0) target = $region53
    $region52: #{tpu_custom_call.1} parent=1 // pred_region
      %993 = dma.done [#allocation4], 128
    $region53: #{tpu_custom_call.1} parent=1 // pred_fallthru
      _
    // Predicated region
    $region54: #{tpu_custom_call.1} parent=1 // pred_check
      _
    $region55: #{tpu_custom_call.1} parent=1 // pred_check_branch
      %995 = sbr.rel (0) target = $region57
    $region56: #{tpu_custom_call.1} parent=1 // pred_region
      %997 = dma.done [#allocation12], 128
    $region57: #{tpu_custom_call.1} parent=1 // pred_fallthru
      _
    %998 = vsyncpa [#allocation3], 1
    %999 = vsyncpa [#allocation6], 1
    %1000 = vsyncpa [#allocation9], 1
    %1001 = vsyncpa [#allocation4], 1
    %1002 = vsyncpa [#allocation12], 1

// kernel: tpu_custom_call.1
$region0: #{tpu_custom_call.1}
  #allocation0 [shape = 'u32[]', space=smem, size = 0x4, offset = 0x4, fixed_abs, tag = 'smem constant byte address 0x4 - core index']
  #allocation1 [shape = 'u32[72,128]{1,0:T(1,128)}', space=vmem, size = 0x9000, scoped, tag = 'internal scratch']
  %s0 = inlined_call_operand.hbm [shape: f32[8,16,32], index: 0, kind: input, shape index: {}]
  %s1 = inlined_call_operand.hbm [shape: f32[8,32], index: 1, kind: input, shape index: {}]
  %s2 = inlined_call_operand.hbm [shape: f32[32,32], index: 2, kind: input, shape index: {}]
  %s3 = inlined_call_operand.hbm [shape: f32[32,32], index: 3, kind: input, shape index: {}]
  %s4 = inlined_call_operand.vmem [shape: f32[1,32], index: 4, kind: input, shape index: {}]
  %s5 = inlined_call_operand.vmem [shape: f32[1,32], index: 5, kind: input, shape index: {}]
  %s6 = inlined_call_operand.hbm [shape: f32[8,32], index: 6, kind: output, shape index: {0}]
  %s7 = inlined_call_operand.hbm [shape: f32[8,16], index: 7, kind: output, shape index: {1}]
  %8 = xla_tuple %s6, %s7
  %s9 = sld [smem:[#allocation0]]
  $region58: #{tpu_custom_call.1} parent=0
    _
  %s11 = ssub.s32 1, %s9
  %s12 = scalar_select 0, %s11, %s9
  $region1: #{tpu_custom_call.1} parent=0
    #allocation2 [shape = 'u8[65536]{0}', space=vmem, size = 0x10000, scoped, tag = 'input window, operand 0, single buffered']
    #allocation3 [shape = 's32[1]{0}', space=sflag, size = 0x4, scoped, tag = 'scoped memory for tpu_custom_call.1']
    #allocation4 [shape = 's32[1]{0}', space=sflag, size = 0x4, scoped, tag = 'scoped memory for tpu_custom_call.1']
    #allocation5 [shape = 'u8[4096]{0}', space=vmem, size = 0x1000, scoped, tag = 'input window, operand 1, single buffered']
    #allocation6 [shape = 's32[1]{0}', space=sflag, size = 0x4, scoped, tag = 'scoped memory for tpu_custom_call.1']
    #allocation7 [shape = 'u8[16384]{0}', space=vmem, size = 0x4000, scoped, tag = 'input window, operand 2, single buffered']
    #allocation8 [shape = 'u8[16384]{0}', space=vmem, size = 0x4000, scoped, tag = 'input window, operand 3, single buffered']
    #allocation9 [shape = 's32[1]{0}', space=sflag, size = 0x4, scoped, tag = 'scoped memory for tpu_custom_call.1']
    #allocation10 [shape = 'u8[4096]{0}', space=vmem, size = 0x1000, scoped, tag = 'output window, operand 0, single buffered']
    #allocation11 [shape = 'u8[4096]{0}', space=vmem, size = 0x1000, scoped, tag = 'output window, operand 1, single buffered']
    #allocation12 [shape = 's32[1]{0}', space=sflag, size = 0x4, scoped, tag = 'scoped memory for tpu_custom_call.1']
    %13 = vsyncpa [#allocation3], 0
    %14 = vsyncpa [#allocation6], 0
    %15 = vsyncpa [#allocation9], 0
    %16 = vsyncpa [#allocation4], 0
    %17 = vsyncpa [#allocation12], 0
    // Predicated region
    $region2: #{tpu_custom_call.1} parent=1 // pred_check
      _
    $region3: #{tpu_custom_call.1} parent=1 // pred_check_branch
      %19 = sbr.rel (0) target = $region5
    $region4: #{tpu_custom_call.1} parent=1 // pred_region
      %21 = vsyncadd [#allocation3], 0
      %s22 = sshll.u32 %s0, 4
      %s23 = int_to_ptr.hbm [resolvable:$true] %s22
      %s24 = sshll.u32 [#allocation2], 4
      %s25 = int_to_ptr.vmem [resolvable:$true] %s24
      %30 = dma.hbm_to_vmem [thread:$0]  %s23, 2048, %s25, [#allocation3], 128, 128, 8
    $region5: #{tpu_custom_call.1} parent=1 // pred_fallthru
      _
    // Predicated region
    $region6: #{tpu_custom_call.1} parent=1 // pred_check
      _
    $region7: #{tpu_custom_call.1} parent=1 // pred_check_branch
      %32 = sbr.rel (0) target = $region9
    $region8: #{tpu_custom_call.1} parent=1 // pred_region
      %34 = vsyncadd [#allocation6], 0
      %s36 = sshll.u32 %s1, 4
      %s37 = int_to_ptr.hbm [resolvable:$true] %s36
      %s38 = sshll.u32 [#allocation5], 4
      %s39 = int_to_ptr.vmem [resolvable:$true] %s38
      %41 = dma.hbm_to_vmem [thread:$0]  %s37, 128, %s39, [#allocation6]
    $region9: #{tpu_custom_call.1} parent=1 // pred_fallthru
      _
    // Predicated region
    $region10: #{tpu_custom_call.1} parent=1 // pred_check
      _
    $region11: #{tpu_custom_call.1} parent=1 // pred_check_branch
      %43 = sbr.rel (0) target = $region13
    $region12: #{tpu_custom_call.1} parent=1 // pred_region
      %45 = vsyncadd [#allocation6], 0
      %s46 = sshll.u32 %s2, 4
      %s47 = int_to_ptr.hbm [resolvable:$true] %s46
      %s48 = sshll.u32 [#allocation7], 4
      %s49 = int_to_ptr.vmem [resolvable:$true] %s48
      %54 = dma.hbm_to_vmem [thread:$0]  %s47, 512, %s49, [#allocation6], 128, 128, 8
    $region13: #{tpu_custom_call.1} parent=1 // pred_fallthru
      _
    // Predicated region
    $region14: #{tpu_custom_call.1} parent=1 // pred_check
      _
    $region15: #{tpu_custom_call.1} parent=1 // pred_check_branch
      %56 = sbr.rel (0) target = $region17
    $region16: #{tpu_custom_call.1} parent=1 // pred_region
      %58 = vsyncadd [#allocation9], 0
      %s59 = sshll.u32 %s3, 4
      %s60 = int_to_ptr.hbm [resolvable:$true] %s59
      %s61 = sshll.u32 [#allocation8], 4
      %s62 = int_to_ptr.vmem [resolvable:$true] %s61
      %67 = dma.hbm_to_vmem [thread:$0]  %s60, 512, %s62, [#allocation9], 128, 128, 8
    $region17: #{tpu_custom_call.1} parent=1 // pred_fallthru
      _
    // Predicated region
    $region18: #{tpu_custom_call.1} parent=1 // pred_check
      _
    $region19: #{tpu_custom_call.1} parent=1 // pred_check_branch
      %69 = sbr.rel (0) target = $region21
    $region20: #{tpu_custom_call.1} parent=1 // pred_region
      _
    $region21: #{tpu_custom_call.1} parent=1 // pred_fallthru
      _
    // Predicated region
    $region22: #{tpu_custom_call.1} parent=1 // pred_check
      _
    $region23: #{tpu_custom_call.1} parent=1 // pred_check_branch
      %71 = sbr.rel (0) target = $region25
    $region24: #{tpu_custom_call.1} parent=1 // pred_region
      _
    $region25: #{tpu_custom_call.1} parent=1 // pred_fallthru
      _
    // Predicated region
    $region26: #{tpu_custom_call.1} parent=1 // pred_check
      _
    $region27: #{tpu_custom_call.1} parent=1 // pred_check_branch
      %73 = sbr.rel (0) target = $region29
    $region28: #{tpu_custom_call.1} parent=1 // pred_region
      %75 = dma.done [#allocation3], 2048
    $region29: #{tpu_custom_call.1} parent=1 // pred_fallthru
      _
    // Predicated region
    $region30: #{tpu_custom_call.1} parent=1 // pred_check
      _
    $region31: #{tpu_custom_call.1} parent=1 // pred_check_branch
      %77 = sbr.rel (0) target = $region33
    $region32: #{tpu_custom_call.1} parent=1 // pred_region
      %79 = dma.done [#allocation6], 128
    $region33: #{tpu_custom_call.1} parent=1 // pred_fallthru
      _
    // Predicated region
    $region34: #{tpu_custom_call.1} parent=1 // pred_check
      _
    $region35: #{tpu_custom_call.1} parent=1 // pred_check_branch
      %81 = sbr.rel (0) target = $region37
    $region36: #{tpu_custom_call.1} parent=1 // pred_region
      %83 = dma.done [#allocation6], 512
    $region37: #{tpu_custom_call.1} parent=1 // pred_fallthru
      _
    // Predicated region
    $region38: #{tpu_custom_call.1} parent=1 // pred_check
      _
    $region39: #{tpu_custom_call.1} parent=1 // pred_check_branch
      %85 = sbr.rel (0) target = $region41
    $region40: #{tpu_custom_call.1} parent=1 // pred_region
      %87 = dma.done [#allocation9], 512
    $region41: #{tpu_custom_call.1} parent=1 // pred_fallthru
      _
    %v88 = vld [vmem:[#allocation2] sm:$0xff]
    %v89 = vld [vmem:[#allocation2 + $0x8] sm:$0xff]
    %v90 = vld [vmem:[#allocation2 + $0x10] sm:$0xff]
    %v91 = vld [vmem:[#allocation2 + $0x18] sm:$0xff]
    %v92 = vld [vmem:[#allocation2 + $0x20] sm:$0xff]
    %v93 = vld [vmem:[#allocation2 + $0x28] sm:$0xff]
    %v94 = vld [vmem:[#allocation2 + $0x30] sm:$0xff]
    %v95 = vld [vmem:[#allocation2 + $0x38] sm:$0xff]
    %v96 = vld [vmem:[#allocation2 + $0x40] sm:$0xff]
    %v97 = vld [vmem:[#allocation2 + $0x48] sm:$0xff]
    %v98 = vld [vmem:[#allocation2 + $0x50] sm:$0xff]
    %v99 = vld [vmem:[#allocation2 + $0x58] sm:$0xff]
    %v100 = vld [vmem:[#allocation2 + $0x60] sm:$0xff]
    %v101 = vld [vmem:[#allocation2 + $0x68] sm:$0xff]
    %v102 = vld [vmem:[#allocation2 + $0x70] sm:$0xff]
    %v103 = vld [vmem:[#allocation2 + $0x78] sm:$0xff]
    %v104 = vld [vmem:[#allocation7] sm:$0xff]
    %v105 = vld [vmem:[#allocation7 + $0x8] sm:$0xff]
    %v106 = vld [vmem:[#allocation7 + $0x10] sm:$0xff]
    %v107 = vld [vmem:[#allocation7 + $0x18] sm:$0xff]
    %vm108 = vcmask 261120
    %v110 = vsel %vm108, %v88, 0
    %v113 = vsel %vm108, %v89, 0
    %v116 = vsel %vm108, %v90, 0
    %v119 = vsel %vm108, %v91, 0
    %v122 = vsel %vm108, %v92, 0
    %v125 = vsel %vm108, %v93, 0
    %v128 = vsel %vm108, %v94, 0
    %v131 = vsel %vm108, %v95, 0
    %v134 = vsel %vm108, %v96, 0
    %v137 = vsel %vm108, %v97, 0
    %v140 = vsel %vm108, %v98, 0
    %v143 = vsel %vm108, %v99, 0
    %v146 = vsel %vm108, %v100, 0
    %v149 = vsel %vm108, %v101, 0
    %v152 = vsel %vm108, %v102, 0
    %v155 = vsel %vm108, %v103, 0
    %157 = vmatpush.msra.mxu0 0.0
    %158 = vmatpush.msra.mxu0 0.0
    %159 = vmatpush.msra.mxu0 0.0
    %160 = vmatpush.msra.mxu0 0.0
    %161 = vmatpush.msra.mxu0 0.0
    %162 = vmatpush.msra.mxu0 0.0
    %163 = vmatpush.msra.mxu0 0.0
    %164 = vmatpush.msra.mxu0 0.0
    %165 = vmatpush.msra.mxu0 0.0
    %166 = vmatpush.msra.mxu0 0.0
    %167 = vmatpush.msra.mxu0 0.0
    %168 = vmatpush.msra.mxu0 0.0
    %169 = vmatpush.msra.mxu0 %v107
    %170 = vmatpush.msra.mxu0 %v106
    %171 = vmatpush.msra.mxu0 %v105
    %172 = vmatpush.msra.mxu0 %v104
    %173 = vmatmul.f32.gmra.mxu0 %v110
    %v174 = vpop.f32.mrf.mxu0
    %v175 = vadd.f32 0.0, %v174
    %176 = vmatmul.f32.gmra.mxu0 %v113
    %v177 = vpop.f32.mrf.mxu0
    %v178 = vadd.f32 0.0, %v177
    %179 = vmatmul.f32.gmra.mxu0 %v116
    %v180 = vpop.f32.mrf.mxu0
    %v181 = vadd.f32 0.0, %v180
    %182 = vmatmul.f32.gmra.mxu0 %v119
    %v183 = vpop.f32.mrf.mxu0
    %v184 = vadd.f32 0.0, %v183
    %185 = vmatmul.f32.gmra.mxu0 %v122
    %v186 = vpop.f32.mrf.mxu0
    %v187 = vadd.f32 0.0, %v186
    %188 = vmatmul.f32.gmra.mxu0 %v125
    %v189 = vpop.f32.mrf.mxu0
    %v190 = vadd.f32 0.0, %v189
    %191 = vmatmul.f32.gmra.mxu0 %v128
    %v192 = vpop.f32.mrf.mxu0
    %v193 = vadd.f32 0.0, %v192
    %194 = vmatmul.f32.gmra.mxu0 %v131
    %v195 = vpop.f32.mrf.mxu0
    %v196 = vadd.f32 0.0, %v195
    %197 = vmatmul.f32.gmra.mxu0 %v134
    %v198 = vpop.f32.mrf.mxu0
    %v199 = vadd.f32 0.0, %v198
    %200 = vmatmul.f32.gmra.mxu0 %v137
    %v201 = vpop.f32.mrf.mxu0
    %v202 = vadd.f32 0.0, %v201
    %203 = vmatmul.f32.gmra.mxu0 %v140
    %v204 = vpop.f32.mrf.mxu0
    %v205 = vadd.f32 0.0, %v204
    %206 = vmatmul.f32.gmra.mxu0 %v143
    %v207 = vpop.f32.mrf.mxu0
    %v208 = vadd.f32 0.0, %v207
    %209 = vmatmul.f32.gmra.mxu0 %v146
    %v210 = vpop.f32.mrf.mxu0
    %v211 = vadd.f32 0.0, %v210
    %212 = vmatmul.f32.gmra.mxu0 %v149
    %v213 = vpop.f32.mrf.mxu0
    %v214 = vadd.f32 0.0, %v213
    %215 = vmatmul.f32.gmra.mxu0 %v152
    %v216 = vpop.f32.mrf.mxu0
    %v217 = vadd.f32 0.0, %v216
    %218 = vmatmul.f32.gmra.mxu0 %v155
    %v219 = vpop.f32.mrf.mxu0
    %v220 = vadd.f32 0.0, %v219
    %221 = vdwg.mxu0
    %v222 = vld [vmem:[#allocation5] sm:$0xff]
    %v223 = vld [vmem:[#allocation8] sm:$0xff]
    %v224 = vld [vmem:[#allocation8 + $0x8] sm:$0xff]
    %v225 = vld [vmem:[#allocation8 + $0x10] sm:$0xff]
    %v226 = vld [vmem:[#allocation8 + $0x18] sm:$0xff]
    %v227 = vld [vmem:[%s4] sm:$0x1]
    %v229 = vperm.slane %v227, 0
    %v232 = vsel %vm108, %v222, 0
    %234 = vmatpush.msra.mxu0 0.0
    %235 = vmatpush.msra.mxu0 0.0
    %236 = vmatpush.msra.mxu0 0.0
    %237 = vmatpush.msra.mxu0 0.0
    %238 = vmatpush.msra.mxu0 0.0
    %239 = vmatpush.msra.mxu0 0.0
    %240 = vmatpush.msra.mxu0 0.0
    %241 = vmatpush.msra.mxu0 0.0
    %242 = vmatpush.msra.mxu0 0.0
    %243 = vmatpush.msra.mxu0 0.0
    %244 = vmatpush.msra.mxu0 0.0
    %245 = vmatpush.msra.mxu0 0.0
    %246 = vmatpush.msra.mxu0 %v226
    %247 = vmatpush.msra.mxu0 %v225
    %248 = vmatpush.msra.mxu0 %v224
    %249 = vmatpush.msra.mxu0 %v223
    %250 = vmatmul.f32.gmra.mxu0 %v232
    %v251 = vpop.f32.mrf.mxu0
    %v252 = vadd.f32 %v229, %v251
    %253 = vdwg.mxu0
    %v255 = vrot.slane %v252, 1
    %v256 = vrot.slane %v252, 2
    %v257 = vrot.slane %v252, 3
    %v258 = vrot.slane %v252, 4
    %v259 = vrot.slane %v252, 5
    %v260 = vrot.slane %v252, 6
    %v261 = vrot.slane %v252, 7
    %v262 = vperm.slane %v252, 0
    %v263 = vperm.slane %v255, 0
    %v264 = vperm.slane %v256, 0
    %v265 = vperm.slane %v257, 0
    %v266 = vperm.slane %v258, 0
    %v267 = vperm.slane %v259, 0
    %v268 = vperm.slane %v260, 0
    %v269 = vperm.slane %v261, 0
    %v278 = vadd.f32 %v175, %v262
    %v279 = vadd.f32 %v178, %v262
    %v280 = vadd.f32 %v181, %v263
    %v281 = vadd.f32 %v184, %v263
    %v282 = vadd.f32 %v187, %v264
    %v283 = vadd.f32 %v190, %v264
    %v284 = vadd.f32 %v193, %v265
    %v285 = vadd.f32 %v196, %v265
    %v286 = vadd.f32 %v199, %v266
    %v287 = vadd.f32 %v202, %v266
    %v288 = vadd.f32 %v205, %v267
    %v289 = vadd.f32 %v208, %v267
    %v290 = vadd.f32 %v211, %v268
    %v291 = vadd.f32 %v214, %v268
    %v292 = vadd.f32 %v217, %v269
    %v293 = vadd.f32 %v220, %v269
    %v294 = vmax.f32 %v278, 0.0
    %v295 = vmax.f32 %v279, 0.0
    %v296 = vmax.f32 %v280, 0.0
    %v297 = vmax.f32 %v281, 0.0
    %v298 = vmax.f32 %v282, 0.0
    %v299 = vmax.f32 %v283, 0.0
    %v300 = vmax.f32 %v284, 0.0
    %v301 = vmax.f32 %v285, 0.0
    %v302 = vmax.f32 %v286, 0.0
    %v303 = vmax.f32 %v287, 0.0
    %v304 = vmax.f32 %v288, 0.0
    %v305 = vmax.f32 %v289, 0.0
    %v306 = vmax.f32 %v290, 0.0
    %v307 = vmax.f32 %v291, 0.0
    %v308 = vmax.f32 %v292, 0.0
    %v309 = vmax.f32 %v293, 0.0
    %v310 = vld [vmem:[%s5] sm:$0x1]
    %v312 = vperm.slane %v310, 0
    %v314 = vmul.f32 %v294, %v312
    %v315 = vmul.f32 %v295, %v312
    %v316 = vmul.f32 %v296, %v312
    %v317 = vmul.f32 %v297, %v312
    %v318 = vmul.f32 %v298, %v312
    %v319 = vmul.f32 %v299, %v312
    %v320 = vmul.f32 %v300, %v312
    %v321 = vmul.f32 %v301, %v312
    %v322 = vmul.f32 %v302, %v312
    %v323 = vmul.f32 %v303, %v312
    %v324 = vmul.f32 %v304, %v312
    %v325 = vmul.f32 %v305, %v312
    %v326 = vmul.f32 %v306, %v312
    %v327 = vmul.f32 %v307, %v312
    %v328 = vmul.f32 %v308, %v312
    %v329 = vmul.f32 %v309, %v312
    %v330 = vsel %vm108, %v314, 0.0
    %331 = vadd.xlane.f32.xlu0 %v330
    %v332 = vpop.xlane.xlu0 %331
    %v333 = vsel %vm108, %v315, 0.0
    %334 = vadd.xlane.f32.xlu0 %v333
    %v335 = vpop.xlane.xlu0 %334
    %v336 = vsel %vm108, %v316, 0.0
    %337 = vadd.xlane.f32.xlu0 %v336
    %v338 = vpop.xlane.xlu0 %337
    %v339 = vsel %vm108, %v317, 0.0
    %340 = vadd.xlane.f32.xlu0 %v339
    %v341 = vpop.xlane.xlu0 %340
    %v342 = vsel %vm108, %v318, 0.0
    %343 = vadd.xlane.f32.xlu0 %v342
    %v344 = vpop.xlane.xlu0 %343
    %v345 = vsel %vm108, %v319, 0.0
    %346 = vadd.xlane.f32.xlu0 %v345
    %v347 = vpop.xlane.xlu0 %346
    %v348 = vsel %vm108, %v320, 0.0
    %349 = vadd.xlane.f32.xlu0 %v348
    %v350 = vpop.xlane.xlu0 %349
    %v351 = vsel %vm108, %v321, 0.0
    %352 = vadd.xlane.f32.xlu0 %v351
    %v353 = vpop.xlane.xlu0 %352
    %v354 = vsel %vm108, %v322, 0.0
    %355 = vadd.xlane.f32.xlu0 %v354
    %v356 = vpop.xlane.xlu0 %355
    %v357 = vsel %vm108, %v323, 0.0
    %358 = vadd.xlane.f32.xlu0 %v357
    %v359 = vpop.xlane.xlu0 %358
    %v360 = vsel %vm108, %v324, 0.0
    %361 = vadd.xlane.f32.xlu0 %v360
    %v362 = vpop.xlane.xlu0 %361
    %v363 = vsel %vm108, %v325, 0.0
    %364 = vadd.xlane.f32.xlu0 %v363
    %v365 = vpop.xlane.xlu0 %364
    %v366 = vsel %vm108, %v326, 0.0
    %367 = vadd.xlane.f32.xlu0 %v366
    %v368 = vpop.xlane.xlu0 %367
    %v369 = vsel %vm108, %v327, 0.0
    %370 = vadd.xlane.f32.xlu0 %v369
    %v371 = vpop.xlane.xlu0 %370
    %v372 = vsel %vm108, %v328, 0.0
    %373 = vadd.xlane.f32.xlu0 %v372
    %v374 = vpop.xlane.xlu0 %373
    %v375 = vsel %vm108, %v329, 0.0
    %376 = vadd.xlane.f32.xlu0 %v375
    %v377 = vpop.xlane.xlu0 %376
    %v394 = vlaneseq
    %v395 = vand.u32 %v394, 127
    %v396 = vperm.slane %v332, %v395
    %v397 = vadd.s32 %v395, 4294967288
    %v398 = vperm.slane %v335, %v397
    %vm399 = vcmask 130112
    %v400 = vsel %vm399, %v398, %v396
    %v401 = vperm.slane %v338, %v395
    %v402 = vperm.slane %v341, %v397
    %v403 = vsel %vm399, %v402, %v401
    %v404 = vperm.slane %v344, %v395
    %v405 = vperm.slane %v347, %v397
    %v406 = vsel %vm399, %v405, %v404
    %v407 = vperm.slane %v350, %v395
    %v408 = vperm.slane %v353, %v397
    %v409 = vsel %vm399, %v408, %v407
    %v410 = vperm.slane %v356, %v395
    %v411 = vperm.slane %v359, %v397
    %v412 = vsel %vm399, %v411, %v410
    %v413 = vperm.slane %v362, %v395
    %v414 = vperm.slane %v365, %v397
    %v415 = vsel %vm399, %v414, %v413
    %v416 = vperm.slane %v368, %v395
    %v417 = vperm.slane %v371, %v397
    %v418 = vsel %vm399, %v417, %v416
    %v419 = vperm.slane %v374, %v395
    %v420 = vperm.slane %v377, %v397
    %v421 = vsel %vm399, %v420, %v419
    %vm422 = vcmask 1041409
    %v423 = vsel %vm422, %v403, %v400
    %vm424 = vcmask 1042434
    %v425 = vsel %vm424, %v406, %v423
    %vm426 = vcmask 1043459
    %v427 = vsel %vm426, %v409, %v425
    %vm428 = vcmask 1044484
    %v429 = vsel %vm428, %v412, %v427
    %vm430 = vcmask 1045509
    %v431 = vsel %vm430, %v415, %v429
    %vm432 = vcmask 1046534
    %v433 = vsel %vm432, %v418, %v431
    %vm434 = vcmask 1047559
    %v435 = vsel %vm434, %v421, %v433
    %vm437 = vcmask 130048
    %v438 = vsel %vm437, %v435, -inf
    %439 = vmax.xlane.f32.xlu0 %v438
    %v440 = vpop.xlane.xlu0 %439
    %v442 = vperm.slane %v440, 0
    %v443 = vperm.slane %v440, 1
    %v444 = vperm.slane %v440, 2
    %v445 = vperm.slane %v440, 3
    %v446 = vperm.slane %v440, 4
    %v447 = vperm.slane %v440, 5
    %v448 = vperm.slane %v440, 6
    %v449 = vperm.slane %v440, 7
    %v458 = vsub.f32 %v332, %v442
    %v459 = vsub.f32 %v335, %v442
    %v460 = vsub.f32 %v338, %v443
    %v461 = vsub.f32 %v341, %v443
    %v462 = vsub.f32 %v344, %v444
    %v463 = vsub.f32 %v347, %v444
    %v464 = vsub.f32 %v350, %v445
    %v465 = vsub.f32 %v353, %v445
    %v466 = vsub.f32 %v356, %v446
    %v467 = vsub.f32 %v359, %v446
    %v468 = vsub.f32 %v362, %v447
    %v469 = vsub.f32 %v365, %v447
    %v470 = vsub.f32 %v368, %v448
    %v471 = vsub.f32 %v371, %v448
    %v472 = vsub.f32 %v374, %v449
    %v473 = vsub.f32 %v377, %v449
    %v474 = vmul.f32 %v458, 1.442695
    %v475 = vpow.pop %v474
    %v476 = vmul.f32 %v459, 1.442695
    %v477 = vpow.pop %v476
    %v478 = vmul.f32 %v460, 1.442695
    %v479 = vpow.pop %v478
    %v480 = vmul.f32 %v461, 1.442695
    %v481 = vpow.pop %v480
    %v482 = vmul.f32 %v462, 1.442695
    %v483 = vpow.pop %v482
    %v484 = vmul.f32 %v463, 1.442695
    %v485 = vpow.pop %v484
    %v486 = vmul.f32 %v464, 1.442695
    %v487 = vpow.pop %v486
    %v488 = vmul.f32 %v465, 1.442695
    %v489 = vpow.pop %v488
    %v490 = vmul.f32 %v466, 1.442695
    %v491 = vpow.pop %v490
    %v492 = vmul.f32 %v467, 1.442695
    %v493 = vpow.pop %v492
    %v494 = vmul.f32 %v468, 1.442695
    %v495 = vpow.pop %v494
    %v496 = vmul.f32 %v469, 1.442695
    %v497 = vpow.pop %v496
    %v498 = vmul.f32 %v470, 1.442695
    %v499 = vpow.pop %v498
    %v500 = vmul.f32 %v471, 1.442695
    %v501 = vpow.pop %v500
    %v502 = vmul.f32 %v472, 1.442695
    %v503 = vpow.pop %v502
    %v504 = vmul.f32 %v473, 1.442695
    %v505 = vpow.pop %v504
    %522 = vset.pattern.permute.xlu0 0
    %523 = vperm.xlu0 %522, %v475
    %v524 = vpop.permute.xlu0 %523
    %525 = vset.pattern.permute.xlu0 0
    %526 = vperm.xlu0 %525, %v477
    %v527 = vpop.permute.xlu0 %526
    %528 = vset.pattern.permute.xlu0 0
    %529 = vperm.xlu0 %528, %v479
    %v530 = vpop.permute.xlu0 %529
    %531 = vset.pattern.permute.xlu0 0
    %532 = vperm.xlu0 %531, %v481
    %v533 = vpop.permute.xlu0 %532
    %534 = vset.pattern.permute.xlu0 0
    %535 = vperm.xlu0 %534, %v483
    %v536 = vpop.permute.xlu0 %535
    %537 = vset.pattern.permute.xlu0 0
    %538 = vperm.xlu0 %537, %v485
    %v539 = vpop.permute.xlu0 %538
    %540 = vset.pattern.permute.xlu0 0
    %541 = vperm.xlu0 %540, %v487
    %v542 = vpop.permute.xlu0 %541
    %543 = vset.pattern.permute.xlu0 0
    %544 = vperm.xlu0 %543, %v489
    %v545 = vpop.permute.xlu0 %544
    %546 = vset.pattern.permute.xlu0 0
    %547 = vperm.xlu0 %546, %v491
    %v548 = vpop.permute.xlu0 %547
    %549 = vset.pattern.permute.xlu0 0
    %550 = vperm.xlu0 %549, %v493
    %v551 = vpop.permute.xlu0 %550
    %552 = vset.pattern.permute.xlu0 0
    %553 = vperm.xlu0 %552, %v495
    %v554 = vpop.permute.xlu0 %553
    %555 = vset.pattern.permute.xlu0 0
    %556 = vperm.xlu0 %555, %v497
    %v557 = vpop.permute.xlu0 %556
    %558 = vset.pattern.permute.xlu0 0
    %559 = vperm.xlu0 %558, %v499
    %v560 = vpop.permute.xlu0 %559
    %561 = vset.pattern.permute.xlu0 0
    %562 = vperm.xlu0 %561, %v501
    %v563 = vpop.permute.xlu0 %562
    %564 = vset.pattern.permute.xlu0 0
    %565 = vperm.xlu0 %564, %v503
    %v566 = vpop.permute.xlu0 %565
    %567 = vset.pattern.permute.xlu0 0
    %568 = vperm.xlu0 %567, %v505
    %v569 = vpop.permute.xlu0 %568
    %v570 = vperm.slane %v524, %v395
    %v571 = vperm.slane %v527, %v397
    %v572 = vsel %vm399, %v571, %v570
    %v573 = vperm.slane %v530, %v395
    %v574 = vperm.slane %v533, %v397
    %v575 = vsel %vm399, %v574, %v573
    %v576 = vperm.slane %v536, %v395
    %v577 = vperm.slane %v539, %v397
    %v578 = vsel %vm399, %v577, %v576
    %v579 = vperm.slane %v542, %v395
    %v580 = vperm.slane %v545, %v397
    %v581 = vsel %vm399, %v580, %v579
    %v582 = vperm.slane %v548, %v395
    %v583 = vperm.slane %v551, %v397
    %v584 = vsel %vm399, %v583, %v582
    %v585 = vperm.slane %v554, %v395
    %v586 = vperm.slane %v557, %v397
    %v587 = vsel %vm399, %v586, %v585
    %v588 = vperm.slane %v560, %v395
    %v589 = vperm.slane %v563, %v397
    %v590 = vsel %vm399, %v589, %v588
    %v591 = vperm.slane %v566, %v395
    %v592 = vperm.slane %v569, %v397
    %v593 = vsel %vm399, %v592, %v591
    %v594 = vsel %vm422, %v575, %v572
    %v595 = vsel %vm424, %v578, %v594
    %v596 = vsel %vm426, %v581, %v595
    %v597 = vsel %vm428, %v584, %v596
    %v598 = vsel %vm430, %v587, %v597
    %v599 = vsel %vm432, %v590, %v598
    %v600 = vsel %vm434, %v593, %v599
    %v602 = vsel %vm437, %v600, 0.0
    %603 = vadd.xlane.f32.xlu0 %v602
    %v604 = vpop.xlane.xlu0 %603
    %v606 = vperm.slane %v604, 0
    %v607 = vperm.slane %v604, 1
    %v608 = vperm.slane %v604, 2
    %v609 = vperm.slane %v604, 3
    %v610 = vperm.slane %v604, 4
    %v611 = vperm.slane %v604, 5
    %v612 = vperm.slane %v604, 6
    %v613 = vperm.slane %v604, 7
    %v622 = vrcp.pop %v606
    %v623 = vmul.f32 %v606, %v622
    %v624 = vsub.f32 1.0, %v623
    %v625 = vmul.f32 %v622, %v624
    %v626 = vadd.f32 %v622, %v625
    %vm627 = vweird.f32 %v606
    %vm628 = vweird.f32 %v622
    %vm629 = vmor %vm627, %vm628
    %v630 = vsel %vm629, %v622, %v626
    %v631 = vand.u32 2147483647, %v606
    %vm632 = vcmp.eq.f32.partialorder %v631, 8.507059e+37
    %v633 = vand.u32 %v606, 2147483648
    %v634 = vor.u32 1.1754944e-38, %v633
    %v635 = vsel %vm632, %v634, %v630
    %v636 = vmul.f32 %v475, %v635
    %v637 = vmul.f32 %v477, %v635
    %v638 = vrcp.pop %v607
    %v639 = vmul.f32 %v607, %v638
    %v640 = vsub.f32 1.0, %v639
    %v641 = vmul.f32 %v638, %v640
    %v642 = vadd.f32 %v638, %v641
    %vm643 = vweird.f32 %v607
    %vm644 = vweird.f32 %v638
    %vm645 = vmor %vm643, %vm644
    %v646 = vsel %vm645, %v638, %v642
    %v647 = vand.u32 2147483647, %v607
    %vm648 = vcmp.eq.f32.partialorder %v647, 8.507059e+37
    %v649 = vand.u32 %v607, 2147483648
    %v650 = vor.u32 1.1754944e-38, %v649
    %v651 = vsel %vm648, %v650, %v646
    %v652 = vmul.f32 %v479, %v651
    %v653 = vmul.f32 %v481, %v651
    %v654 = vrcp.pop %v608
    %v655 = vmul.f32 %v608, %v654
    %v656 = vsub.f32 1.0, %v655
    %v657 = vmul.f32 %v654, %v656
    %v658 = vadd.f32 %v654, %v657
    %vm659 = vweird.f32 %v608
    %vm660 = vweird.f32 %v654
    %vm661 = vmor %vm659, %vm660
    %v662 = vsel %vm661, %v654, %v658
    %v663 = vand.u32 2147483647, %v608
    %vm664 = vcmp.eq.f32.partialorder %v663, 8.507059e+37
    %v665 = vand.u32 %v608, 2147483648
    %v666 = vor.u32 1.1754944e-38, %v665
    %v667 = vsel %vm664, %v666, %v662
    %v668 = vmul.f32 %v483, %v667
    %v669 = vmul.f32 %v485, %v667
    %v670 = vrcp.pop %v609
    %v671 = vmul.f32 %v609, %v670
    %v672 = vsub.f32 1.0, %v671
    %v673 = vmul.f32 %v670, %v672
    %v674 = vadd.f32 %v670, %v673
    %vm675 = vweird.f32 %v609
    %vm676 = vweird.f32 %v670
    %vm677 = vmor %vm675, %vm676
    %v678 = vsel %vm677, %v670, %v674
    %v679 = vand.u32 2147483647, %v609
    %vm680 = vcmp.eq.f32.partialorder %v679, 8.507059e+37
    %v681 = vand.u32 %v609, 2147483648
    %v682 = vor.u32 1.1754944e-38, %v681
    %v683 = vsel %vm680, %v682, %v678
    %v684 = vmul.f32 %v487, %v683
    %v685 = vmul.f32 %v489, %v683
    %v686 = vrcp.pop %v610
    %v687 = vmul.f32 %v610, %v686
    %v688 = vsub.f32 1.0, %v687
    %v689 = vmul.f32 %v686, %v688
    %v690 = vadd.f32 %v686, %v689
    %vm691 = vweird.f32 %v610
    %vm692 = vweird.f32 %v686
    %vm693 = vmor %vm691, %vm692
    %v694 = vsel %vm693, %v686, %v690
    %v695 = vand.u32 2147483647, %v610
    %vm696 = vcmp.eq.f32.partialorder %v695, 8.507059e+37
    %v697 = vand.u32 %v610, 2147483648
    %v698 = vor.u32 1.1754944e-38, %v697
    %v699 = vsel %vm696, %v698, %v694
    %v700 = vmul.f32 %v491, %v699
    %v701 = vmul.f32 %v493, %v699
    %v702 = vrcp.pop %v611
    %v703 = vmul.f32 %v611, %v702
    %v704 = vsub.f32 1.0, %v703
    %v705 = vmul.f32 %v702, %v704
    %v706 = vadd.f32 %v702, %v705
    %vm707 = vweird.f32 %v611
    %vm708 = vweird.f32 %v702
    %vm709 = vmor %vm707, %vm708
    %v710 = vsel %vm709, %v702, %v706
    %v711 = vand.u32 2147483647, %v611
    %vm712 = vcmp.eq.f32.partialorder %v711, 8.507059e+37
    %v713 = vand.u32 %v611, 2147483648
    %v714 = vor.u32 1.1754944e-38, %v713
    %v715 = vsel %vm712, %v714, %v710
    %v716 = vmul.f32 %v495, %v715
    %v717 = vmul.f32 %v497, %v715
    %v718 = vrcp.pop %v612
    %v719 = vmul.f32 %v612, %v718
    %v720 = vsub.f32 1.0, %v719
    %v721 = vmul.f32 %v718, %v720
    %v722 = vadd.f32 %v718, %v721
    %vm723 = vweird.f32 %v612
    %vm724 = vweird.f32 %v718
    %vm725 = vmor %vm723, %vm724
    %v726 = vsel %vm725, %v718, %v722
    %v727 = vand.u32 2147483647, %v612
    %vm728 = vcmp.eq.f32.partialorder %v727, 8.507059e+37
    %v729 = vand.u32 %v612, 2147483648
    %v730 = vor.u32 1.1754944e-38, %v729
    %v731 = vsel %vm728, %v730, %v726
    %v732 = vmul.f32 %v499, %v731
    %v733 = vmul.f32 %v501, %v731
    %v734 = vrcp.pop %v613
    %v735 = vmul.f32 %v613, %v734
    %v736 = vsub.f32 1.0, %v735
    %v737 = vmul.f32 %v734, %v736
    %v738 = vadd.f32 %v734, %v737
    %vm739 = vweird.f32 %v613
    %vm740 = vweird.f32 %v734
    %vm741 = vmor %vm739, %vm740
    %v742 = vsel %vm741, %v734, %v738
    %v743 = vand.u32 2147483647, %v613
    %vm744 = vcmp.eq.f32.partialorder %v743, 8.507059e+37
    %v745 = vand.u32 %v613, 2147483648
    %v746 = vor.u32 1.1754944e-38, %v745
    %v747 = vsel %vm744, %v746, %v742
    %v748 = vmul.f32 %v503, %v747
    %v749 = vmul.f32 %v505, %v747
    %751 = vset.pattern.permute.xlu0 0
    %752 = vperm.xlu0 %751, %v636
    %v753 = vpop.permute.xlu0 %752
    %756 = vset.pattern.permute.xlu0 0
    %757 = vperm.xlu0 %756, %v637
    %v758 = vpop.permute.xlu0 %757
    %761 = vset.pattern.permute.xlu0 0
    %762 = vperm.xlu0 %761, %v652
    %v763 = vpop.permute.xlu0 %762
    %766 = vset.pattern.permute.xlu0 0
    %767 = vperm.xlu0 %766, %v653
    %v768 = vpop.permute.xlu0 %767
    %771 = vset.pattern.permute.xlu0 0
    %772 = vperm.xlu0 %771, %v668
    %v773 = vpop.permute.xlu0 %772
    %776 = vset.pattern.permute.xlu0 0
    %777 = vperm.xlu0 %776, %v669
    %v778 = vpop.permute.xlu0 %777
    %781 = vset.pattern.permute.xlu0 0
    %782 = vperm.xlu0 %781, %v684
    %v783 = vpop.permute.xlu0 %782
    %786 = vset.pattern.permute.xlu0 0
    %787 = vperm.xlu0 %786, %v685
    %v788 = vpop.permute.xlu0 %787
    %791 = vset.pattern.permute.xlu0 0
    %792 = vperm.xlu0 %791, %v700
    %v793 = vpop.permute.xlu0 %792
    %796 = vset.pattern.permute.xlu0 0
    %797 = vperm.xlu0 %796, %v701
    %v798 = vpop.permute.xlu0 %797
    %801 = vset.pattern.permute.xlu0 0
    %802 = vperm.xlu0 %801, %v716
    %v803 = vpop.permute.xlu0 %802
    %806 = vset.pattern.permute.xlu0 0
    %807 = vperm.xlu0 %806, %v717
    %v808 = vpop.permute.xlu0 %807
    %811 = vset.pattern.permute.xlu0 0
    %812 = vperm.xlu0 %811, %v732
    %v813 = vpop.permute.xlu0 %812
    %816 = vset.pattern.permute.xlu0 0
    %817 = vperm.xlu0 %816, %v733
    %v818 = vpop.permute.xlu0 %817
    %821 = vset.pattern.permute.xlu0 0
    %822 = vperm.xlu0 %821, %v748
    %v823 = vpop.permute.xlu0 %822
    %826 = vset.pattern.permute.xlu0 0
    %827 = vperm.xlu0 %826, %v749
    %v828 = vpop.permute.xlu0 %827
    %v830 = vmul.f32 %v88, %v753
    %v831 = vmul.f32 %v89, %v758
    %v832 = vmul.f32 %v90, %v763
    %v833 = vmul.f32 %v91, %v768
    %v834 = vmul.f32 %v92, %v773
    %v835 = vmul.f32 %v93, %v778
    %v836 = vmul.f32 %v94, %v783
    %v837 = vmul.f32 %v95, %v788
    %v838 = vmul.f32 %v96, %v793
    %v839 = vmul.f32 %v97, %v798
    %v840 = vmul.f32 %v98, %v803
    %v841 = vmul.f32 %v99, %v808
    %v842 = vmul.f32 %v100, %v813
    %v843 = vmul.f32 %v101, %v818
    %v844 = vmul.f32 %v102, %v823
    %v845 = vmul.f32 %v103, %v828
    %v846 = vsel %vm108, %v830, 0.0
    %v847 = vsel %vm108, %v831, 0.0
    %v848 = vadd.f32 %v846, %v847
    %v849 = vrot.slane %v848, 4
    %v850 = vadd.f32 %v848, %v849
    %v851 = vrot.slane %v850, 2
    %v852 = vadd.f32 %v850, %v851
    %v853 = vrot.slane %v852, 1
    %v854 = vadd.f32 %v852, %v853
    %v855 = vsel %vm108, %v832, 0.0
    %v856 = vsel %vm108, %v833, 0.0
    %v857 = vadd.f32 %v855, %v856
    %v858 = vrot.slane %v857, 4
    %v859 = vadd.f32 %v857, %v858
    %v860 = vrot.slane %v859, 2
    %v861 = vadd.f32 %v859, %v860
    %v862 = vrot.slane %v861, 1
    %v863 = vadd.f32 %v861, %v862
    %v864 = vsel %vm108, %v834, 0.0
    %v865 = vsel %vm108, %v835, 0.0
    %v866 = vadd.f32 %v864, %v865
    %v867 = vrot.slane %v866, 4
    %v868 = vadd.f32 %v866, %v867
    %v869 = vrot.slane %v868, 2
    %v870 = vadd.f32 %v868, %v869
    %v871 = vrot.slane %v870, 1
    %v872 = vadd.f32 %v870, %v871
    %v873 = vsel %vm108, %v836, 0.0
    %v874 = vsel %vm108, %v837, 0.0
    %v875 = vadd.f32 %v873, %v874
    %v876 = vrot.slane %v875, 4
    %v877 = vadd.f32 %v875, %v876
    %v878 = vrot.slane %v877, 2
    %v879 = vadd.f32 %v877, %v878
    %v880 = vrot.slane %v879, 1
    %v881 = vadd.f32 %v879, %v880
    %v882 = vsel %vm108, %v838, 0.0
    %v883 = vsel %vm108, %v839, 0.0
    %v884 = vadd.f32 %v882, %v883
    %v885 = vrot.slane %v884, 4
    %v886 = vadd.f32 %v884, %v885
    %v887 = vrot.slane %v886, 2
    %v888 = vadd.f32 %v886, %v887
    %v889 = vrot.slane %v888, 1
    %v890 = vadd.f32 %v888, %v889
    %v891 = vsel %vm108, %v840, 0.0
    %v892 = vsel %vm108, %v841, 0.0
    %v893 = vadd.f32 %v891, %v892
    %v894 = vrot.slane %v893, 4
    %v895 = vadd.f32 %v893, %v894
    %v896 = vrot.slane %v895, 2
    %v897 = vadd.f32 %v895, %v896
    %v898 = vrot.slane %v897, 1
    %v899 = vadd.f32 %v897, %v898
    %v900 = vsel %vm108, %v842, 0.0
    %v901 = vsel %vm108, %v843, 0.0
    %v902 = vadd.f32 %v900, %v901
    %v903 = vrot.slane %v902, 4
    %v904 = vadd.f32 %v902, %v903
    %v905 = vrot.slane %v904, 2
    %v906 = vadd.f32 %v904, %v905
    %v907 = vrot.slane %v906, 1
    %v908 = vadd.f32 %v906, %v907
    %v909 = vsel %vm108, %v844, 0.0
    %v910 = vsel %vm108, %v845, 0.0
    %v911 = vadd.f32 %v909, %v910
    %v912 = vrot.slane %v911, 4
    %v913 = vadd.f32 %v911, %v912
    %v914 = vrot.slane %v913, 2
    %v915 = vadd.f32 %v913, %v914
    %v916 = vrot.slane %v915, 1
    %v917 = vadd.f32 %v915, %v916
    %v926 = vsel %vm422, %v863, %v854
    %v927 = vsel %vm424, %v872, %v926
    %v928 = vsel %vm426, %v881, %v927
    %v929 = vsel %vm428, %v890, %v928
    %v930 = vsel %vm430, %v899, %v929
    %v931 = vsel %vm432, %v908, %v930
    %v932 = vsel %vm434, %v917, %v931
    %934 = vst.msk [vmem:[#allocation10] sm:$0xff] %vm108, %v932
    %v935 = vperm.slane %v753, %v395
    %v936 = vperm.slane %v758, %v397
    %v937 = vsel %vm399, %v936, %v935
    %v938 = vperm.slane %v763, %v395
    %v939 = vperm.slane %v768, %v397
    %v940 = vsel %vm399, %v939, %v938
    %v941 = vperm.slane %v773, %v395
    %v942 = vperm.slane %v778, %v397
    %v943 = vsel %vm399, %v942, %v941
    %v944 = vperm.slane %v783, %v395
    %v945 = vperm.slane %v788, %v397
    %v946 = vsel %vm399, %v945, %v944
    %v947 = vperm.slane %v793, %v395
    %v948 = vperm.slane %v798, %v397
    %v949 = vsel %vm399, %v948, %v947
    %v950 = vperm.slane %v803, %v395
    %v951 = vperm.slane %v808, %v397
    %v952 = vsel %vm399, %v951, %v950
    %v953 = vperm.slane %v813, %v395
    %v954 = vperm.slane %v818, %v397
    %v955 = vsel %vm399, %v954, %v953
    %v956 = vperm.slane %v823, %v395
    %v957 = vperm.slane %v828, %v397
    %v958 = vsel %vm399, %v957, %v956
    %v959 = vsel %vm422, %v940, %v937
    %v960 = vsel %vm424, %v943, %v959
    %v961 = vsel %vm426, %v946, %v960
    %v962 = vsel %vm428, %v949, %v961
    %v963 = vsel %vm430, %v952, %v962
    %v964 = vsel %vm432, %v955, %v963
    %v965 = vsel %vm434, %v958, %v964
    %967 = vst.msk [vmem:[#allocation11] sm:$0xff] %vm437, %v965
    // Predicated region
    $region42: #{tpu_custom_call.1} parent=1 // pred_check
      _
    $region43: #{tpu_custom_call.1} parent=1 // pred_check_branch
      %969 = sbr.rel (0) target = $region45
    $region44: #{tpu_custom_call.1} parent=1 // pred_region
      %971 = vsyncadd [#allocation4], 0
      %s973 = sshll.u32 [#allocation10], 4
      %s974 = int_to_ptr.vmem [resolvable:$true] %s973
      %s975 = sshll.u32 %s6, 4
      %s976 = int_to_ptr.hbm [resolvable:$true] %s975
      %978 = dma.vmem_to_hbm [thread:$0]  %s974, 128, %s976, [#allocation4]
    $region45: #{tpu_custom_call.1} parent=1 // pred_fallthru
      _
    // Predicated region
    $region46: #{tpu_custom_call.1} parent=1 // pred_check
      _
    $region47: #{tpu_custom_call.1} parent=1 // pred_check_branch
      %980 = sbr.rel (0) target = $region49
    $region48: #{tpu_custom_call.1} parent=1 // pred_region
      %982 = vsyncadd [#allocation12], 0
      %s984 = sshll.u32 [#allocation11], 4
      %s985 = int_to_ptr.vmem [resolvable:$true] %s984
      %s986 = sshll.u32 %s7, 4
      %s987 = int_to_ptr.hbm [resolvable:$true] %s986
      %989 = dma.vmem_to_hbm [thread:$0]  %s985, 128, %s987, [#allocation12]
    $region49: #{tpu_custom_call.1} parent=1 // pred_fallthru
      _
    // Predicated region
    $region50: #{tpu_custom_call.1} parent=1 // pred_check
      _
    $region51: #{tpu_custom_call.1} parent=1 // pred_check_branch
      %991 = sbr.rel (0) target = $region53
    $region52: #{tpu_custom_call.1} parent=1 // pred_region
      %993 = dma.done [#allocation4], 128
    $region53: #{tpu_custom_call.1} parent=1 // pred_fallthru
      _
    // Predicated region
    $region54: #{tpu_custom_call.1} parent=1 // pred_check
      _
    $region55: #{tpu_custom_call.1} parent=1 // pred_check_branch
      %995 = sbr.rel (0) target = $region57
    $region56: #{tpu_custom_call.1} parent=1 // pred_region
      %997 = dma.done [#allocation12], 128
    $region57: #{tpu_custom_call.1} parent=1 // pred_fallthru
      _
    %998 = vsyncpa [#allocation3], 1
    %999 = vsyncpa [#allocation6], 1
    %1000 = vsyncpa [#allocation9], 1
    %1001 = vsyncpa [#allocation4], 1
    %1002 = vsyncpa [#allocation12], 1

</llo_original>
